<compile_context>
chip_gen: v6e
topology: v6e:2x2x1
jax: 0.10.0
libtpu: 0.0.40
codegen_flags: <defaults>
</compile_context>

<pallas_src>
import functools

import jax
import jax.numpy as jnp
import numpy as np
from jax.experimental import pallas as pl
from jax.experimental.pallas import tpu as pltpu

BN_EPS = 1e-5
FACET_TILE = 128    # rows per grid step, facet-space kernel
VERTEX_TILE = 128   # rows per grid step, vertex-space kernel
VMEM_LIMIT = 32 * 1024 * 1024   # safe on v5e/v6e/v7x


def _pick_row_tile(n, target):
    """Largest tile <= target that is a multiple of 8 and divides n (or n itself)."""
    if n <= target:
        return n
    for t in range(target, 7, -8):
        if n % t == 0:
            return t
    # Fallback: ragged last block.  Both kernels are row-local, so padded rows
    # only produce padded (masked-on-store) outputs.
    return target


# ------------------------------------------------------------------
# Kernel A (facet space, fused):
#   net = ReLU((x @ w0) * scale0 + shift0)          # MLP0 with folded BN stats
#   z[d] = net * (coeff @ wdw[d])                   # fuzzy depthwise product
# ------------------------------------------------------------------
def _facet_kernel(x_ref, coeff_ref, w0_ref, wdw_ref, s0_ref, b0_ref, z_ref, *, depth):
    x = x_ref[...].astype(jnp.bfloat16)                                # [TF, Cin]
    y = jnp.dot(x, w0_ref[...], preferred_element_type=jnp.float32)    # [TF, C]
    net = jnp.maximum(y * s0_ref[...] + b0_ref[...], 0.0)              # BN + ReLU (f32)
    coeff = coeff_ref[...].astype(jnp.bfloat16)                        # [TF, K]
    for d in range(depth):                                             # static unroll (D=2)
        m_d = jnp.dot(coeff, wdw_ref[d], preferred_element_type=jnp.float32)  # [TF, C]
        z_ref[d] = (net * m_d).astype(z_ref.dtype)


# ------------------------------------------------------------------
# Kernel B (vertex space):
#   v = sum_d h[d] @ wp[d]                          # pointwise projection
#   out = ReLU(v * scale1 + shift1)                 # BN with folded batch stats
# ------------------------------------------------------------------
def _vertex_kernel(h_ref, wp_ref, s1_ref, b1_ref, o_ref, *, depth):
    acc = jnp.zeros(o_ref.shape, jnp.float32)                          # [TV, Cout]
    for d in range(depth):                                             # static unroll (D=2)
        hd = h_ref[d].astype(jnp.bfloat16)                             # [TV, C]
        acc = acc + jnp.dot(hd, wp_ref[d], preferred_element_type=jnp.float32)
    o_ref[...] = jnp.maximum(acc * s1_ref[...] + b1_ref[...], 0.0)


# ------------------------------------------------------------------
# FirstBlock forward (jit-compiled wrapper)
# ------------------------------------------------------------------
@functools.partial(jax.jit, static_argnames=("num_out_vertices",))
def first_block_forward(params, inputs, face, full_nf_count, full_vt_map,
                        filt_coeff, *, num_out_vertices):
    f_rows, cin = inputs.shape
    w0 = params["w0"]
    cout = w0.shape[1]
    wdw = params["wdw"]
    kbins = wdw.shape[0]
    depth = wdw.shape[1] // cout
    wp = params["wp"]
    v_rows = num_out_vertices

    # ---- BN0 batch stats folded analytically (exact, biased/training-mode) ----
    sum_x = jnp.sum(inputs, axis=0)                           # [Cin]
    gram_x = inputs.T @ inputs                                # [Cin, Cin]
    mean0 = (sum_x @ w0) / f_rows
    ex2_0 = jnp.einsum("ij,ik,kj->j", w0, gram_x, w0) / f_rows
    var0 = jnp.maximum(ex2_0 - mean0 ** 2, 0.0)
    s0 = params["g0"] * jax.lax.rsqrt(var0 + BN_EPS)
    scale0 = s0.reshape(1, cout)
    shift0 = (params["b0"] - mean0 * s0).reshape(1, cout)

    # d-major column layout split into per-depth slices:
    #   wdw[k, d*C + c] -> wdw3[d, k, c] ;  wp[d*C + c, j] -> wp3[d, c, j]
    wdw3 = wdw.reshape(kbins, depth, cout).transpose(1, 0, 2)     # [D, K, C]
    wp3 = wp.reshape(depth, cout, cout)                           # [D, C, Cout]

    # ---- Kernel A: fused MLP0 + depthwise multiply, tiled over facets ----
    tf = _pick_row_tile(f_rows, FACET_TILE)
    z3 = pl.pallas_call(
        functools.partial(_facet_kernel, depth=depth),
        out_shape=jax.ShapeDtypeStruct((depth, f_rows, cout), jnp.float32),
        grid=(pl.cdiv(f_rows, tf),),
        in_specs=[
            pl.BlockSpec((tf, cin), lambda i: (i, 0)),
            pl.BlockSpec((tf, kbins), lambda i: (i, 0)),
            pl.BlockSpec((cin, cout), lambda i: (0, 0)),
            pl.BlockSpec((depth, kbins, cout), lambda i: (0, 0, 0)),
            pl.BlockSpec((1, cout), lambda i: (0, 0)),
            pl.BlockSpec((1, cout), lambda i: (0, 0)),
        ],
        out_specs=pl.BlockSpec((depth, tf, cout), lambda i: (0, i, 0)),
        compiler_params=pltpu.CompilerParams(
            dimension_semantics=("parallel",),
            vmem_limit_bytes=VMEM_LIMIT),
    )(inputs, filt_coeff, w0.astype(jnp.bfloat16), wdw3.astype(jnp.bfloat16),
      scale0, shift0)

    # ---- facet -> vertex scatter: sparse O(F) scatter-add, pre-inverted nf ----
    # TODO(synk): a fully in-Pallas gather would need per-vertex incidence lists
    # via PrefetchScalarGridSpec; the XLA scatter-add already avoids the dense
    # [V, F] matmul the review flagged.
    rows = full_vt_map[face]                                      # [F, 3] output vertex rows
    h_sum = jnp.zeros((depth, v_rows, cout), jnp.float32)
    for c in range(3):
        h_sum = h_sum.at[:, rows[:, c], :].add(z3)
    inv_nf = 1.0 / jnp.maximum(full_nf_count.astype(jnp.float32), 1.0)  # guard isolated verts
    h3 = h_sum * inv_nf[None, :, None]                            # [D, V, C]

    # ---- BN1 batch stats folded analytically from h (exact) ----
    mean1 = jnp.einsum("dvc,dcj->j", h3, wp3) / v_rows
    gram_h = jnp.einsum("dvc,evk->dcek", h3, h3)
    ex2_1 = jnp.einsum("dcj,dcek,ekj->j", wp3, gram_h, wp3) / v_rows
    var1 = jnp.maximum(ex2_1 - mean1 ** 2, 0.0)
    s1 = params["g1"] * jax.lax.rsqrt(var1 + BN_EPS)
    scale1 = s1.reshape(1, cout)
    shift1 = (params["b1"] - mean1 * s1).reshape(1, cout)

    # ---- Kernel B: pointwise projection + BN + ReLU, tiled over vertices ----
    tv = _pick_row_tile(v_rows, VERTEX_TILE)
    out = pl.pallas_call(
        functools.partial(_vertex_kernel, depth=depth),
        out_shape=jax.ShapeDtypeStruct((v_rows, cout), jnp.float32),
        grid=(pl.cdiv(v_rows, tv),),
        in_specs=[
            pl.BlockSpec((depth, tv, cout), lambda i: (0, i, 0)),
            pl.BlockSpec((depth, cout, cout), lambda i: (0, 0, 0)),
            pl.BlockSpec((1, cout), lambda i: (0, 0)),
            pl.BlockSpec((1, cout), lambda i: (0, 0)),
        ],
        out_specs=pl.BlockSpec((tv, cout), lambda i: (i, 0)),
        compiler_params=pltpu.CompilerParams(
            dimension_semantics=("parallel",),
            vmem_limit_bytes=VMEM_LIMIT),
    )(h3, wp3.astype(jnp.bfloat16), scale1, shift1)
    return out


# ------------------------------------------------------------------
# Pure-JAX f32 reference (same math, no Pallas, no bf16) for sanity check.
# ------------------------------------------------------------------
def first_block_reference(params, inputs, face, full_nf_count, full_vt_map,
                          filt_coeff, *, num_out_vertices):
    y = inputs @ params["w0"]
    mean = y.mean(0, keepdims=True)
    var = ((y - mean) ** 2).mean(0, keepdims=True)
    net = jnp.maximum((y - mean) / jnp.sqrt(var + BN_EPS) * params["g0"] + params["b0"], 0.0)

    d = params["wdw"].shape[1] // params["w0"].shape[1]
    m = filt_coeff @ params["wdw"]
    z = jnp.concatenate([net] * d, axis=1) * m                     # d-major columns
    rows = full_vt_map[face]
    h = jnp.zeros((num_out_vertices, z.shape[1]), jnp.float32)
    for c in range(3):
        h = h.at[rows[:, c]].add(z)
    h = h / jnp.maximum(full_nf_count.astype(jnp.float32), 1.0)[:, None]

    y = h @ params["wp"]
    mean = y.mean(0, keepdims=True)
    var = ((y - mean) ** 2).mean(0, keepdims=True)
    return jnp.maximum((y - mean) / jnp.sqrt(var + BN_EPS) * params["g1"] + params["b1"], 0.0)


if __name__ == "__main__":
    # Small synthetic problem.
    in_channels = 6
    out_channels = 32
    mesh_kernel_size = 9
    depth_multiplier = 2
    num_faces = 512
    num_verts = 256

    key = jax.random.PRNGKey(0)
    k_in, k_w0, k_dw, k_wp, k_coef, k_g0, k_b0, k_g1, k_b1 = jax.random.split(key, 9)

    params = {
        "w0": 0.1 * jax.random.normal(k_w0, (in_channels, out_channels), jnp.float32),
        "g0": 1.0 + 0.1 * jax.random.normal(k_g0, (out_channels,), jnp.float32),
        "b0": 0.1 * jax.random.normal(k_b0, (out_channels,), jnp.float32),
        # depthwise kernel, flattened d-major: wdw[k, d*C + c] = W[k, c, d]
        "wdw": 0.1 * jax.random.normal(
            k_dw, (mesh_kernel_size, depth_multiplier * out_channels), jnp.float32),
        "wp": 0.1 * jax.random.normal(
            k_wp, (depth_multiplier * out_channels, out_channels), jnp.float32),
        "g1": 1.0 + 0.1 * jax.random.normal(k_g1, (out_channels,), jnp.float32),
        "b1": 0.1 * jax.random.normal(k_b1, (out_channels,), jnp.float32),
    }

    # Deterministic synthetic mesh: each facet has 3 distinct vertices, every
    # vertex is incident to 6 facets.
    face_np = np.stack([
        np.arange(num_faces) % num_verts,
        (np.arange(num_faces) + 1) % num_verts,
        (np.arange(num_faces) + 3) % num_verts,
    ], axis=1).astype(np.int32)
    face = jnp.asarray(face_np)
    full_vt_map = jnp.arange(num_verts, dtype=jnp.int32)          # identity map in FirstBlock
    full_nf_count = jnp.asarray(
        np.bincount(face_np.reshape(-1), minlength=num_verts).astype(np.int32))

    inputs = jax.random.normal(k_in, (num_faces, in_channels), jnp.float32)
    filt_coeff = jax.nn.softmax(
        jax.random.normal(k_coef, (num_faces, mesh_kernel_size), jnp.float32), axis=-1)

    out = first_block_forward(params, inputs, face, full_nf_count, full_vt_map,
                              filt_coeff, num_out_vertices=num_verts)
    out = jax.block_until_ready(out)

    ref = first_block_reference(params, inputs, face, full_nf_count, full_vt_map,
                                filt_coeff, num_out_vertices=num_verts)
    assert out.shape == (num_verts, out_channels), out.shape
    np.testing.assert_allclose(np.asarray(out), np.asarray(ref), rtol=2e-2, atol=2e-2)

    print("KERNEL_OK")
</pallas_src>

<mosaic_0001>
module attributes {stable_mosaic.version = 11 : i64} {
  func.func @_facet_kernel(%arg0: i32, %arg1: memref<128x6xf32, #tpu.memory_space<vmem>>, %arg2: memref<128x9xf32, #tpu.memory_space<vmem>>, %arg3: memref<6x32xbf16, #tpu.memory_space<vmem>>, %arg4: memref<2x9x32xbf16, #tpu.memory_space<vmem>>, %arg5: memref<1x32xf32, #tpu.memory_space<vmem>>, %arg6: memref<1x32xf32, #tpu.memory_space<vmem>>, %arg7: memref<2x128x32xf32, #tpu.memory_space<vmem>>) attributes {dimension_semantics = [#tpu.dimension_semantics<parallel>], iteration_bounds = array<i64: 4>, scalar_prefetch = 0 : i64, scratch_operands = 0 : i64, tpu.core_type = #tpu.core_type<tc>, window_params = [{transform_indices = @transform_0, window_bounds = array<i64: 128, 6>}, {transform_indices = @transform_1, window_bounds = array<i64: 128, 9>}, {pipeline_mode = #tpu.pipeline_mode<synchronous>, transform_indices = @transform_2, window_bounds = array<i64: 6, 32>}, {pipeline_mode = #tpu.pipeline_mode<synchronous>, transform_indices = @transform_3, window_bounds = array<i64: 2, 9, 32>}, {pipeline_mode = #tpu.pipeline_mode<synchronous>, transform_indices = @transform_4, window_bounds = array<i64: 1, 32>}, {pipeline_mode = #tpu.pipeline_mode<synchronous>, transform_indices = @transform_5, window_bounds = array<i64: 1, 32>}, {transform_indices = @transform_6, window_bounds = array<i64: 2, 128, 32>}]} {
    %c0 = arith.constant 0 : index
    %c0_0 = arith.constant 0 : index
    %0 = vector.load %arg1[%c0, %c0_0] : memref<128x6xf32, #tpu.memory_space<vmem>>, vector<128x6xf32>
    %1 = arith.truncf %0 : vector<128x6xf32> to vector<128x6xbf16>
    %c0_1 = arith.constant 0 : index
    %c0_2 = arith.constant 0 : index
    %2 = vector.load %arg3[%c0_1, %c0_2] : memref<6x32xbf16, #tpu.memory_space<vmem>>, vector<6x32xbf16>
    %cst = arith.constant dense<0.000000e+00> : vector<128x32xf32>
    %3 = tpu.matmul %1, %2, %cst {dimension_numbers = #tpu.dot_dimension_numbers<[1], [0], [0], [1], [0, 0, 1, 1], [], []>} : vector<128x6xbf16>, vector<6x32xbf16>, vector<128x32xf32> -> vector<128x32xf32>
    %c0_3 = arith.constant 0 : index
    %c0_4 = arith.constant 0 : index
    %4 = vector.load %arg5[%c0_3, %c0_4] : memref<1x32xf32, #tpu.memory_space<vmem>>, vector<1x32xf32>
    %5 = vector.broadcast %4 : vector<1x32xf32> to vector<128x32xf32>
    %6 = arith.mulf %3, %5 : vector<128x32xf32>
    %c0_5 = arith.constant 0 : index
    %c0_6 = arith.constant 0 : index
    %7 = vector.load %arg6[%c0_5, %c0_6] : memref<1x32xf32, #tpu.memory_space<vmem>>, vector<1x32xf32>
    %8 = vector.broadcast %7 : vector<1x32xf32> to vector<128x32xf32>
    %9 = arith.addf %6, %8 : vector<128x32xf32>
    %cst_7 = arith.constant 0.000000e+00 : f32
    %10 = vector.broadcast %cst_7 : f32 to vector<128x32xf32>
    %11 = arith.maximumf %9, %10 : vector<128x32xf32>
    %c0_8 = arith.constant 0 : index
    %c0_9 = arith.constant 0 : index
    %12 = vector.load %arg2[%c0_8, %c0_9] : memref<128x9xf32, #tpu.memory_space<vmem>>, vector<128x9xf32>
    %13 = arith.truncf %12 : vector<128x9xf32> to vector<128x9xbf16>
    %c0_10 = arith.constant 0 : index
    %c0_11 = arith.constant 0 : index
    %c0_12 = arith.constant 0 : index
    %14 = vector.load %arg4[%c0_10, %c0_11, %c0_12] : memref<2x9x32xbf16, #tpu.memory_space<vmem>>, vector<1x9x32xbf16>
    %15 = vector.shape_cast %14 : vector<1x9x32xbf16> to vector<9x32xbf16>
    %cst_13 = arith.constant dense<0.000000e+00> : vector<128x32xf32>
    %16 = tpu.matmul %13, %15, %cst_13 {dimension_numbers = #tpu.dot_dimension_numbers<[1], [0], [0], [1], [0, 0, 1, 1], [], []>} : vector<128x9xbf16>, vector<9x32xbf16>, vector<128x32xf32> -> vector<128x32xf32>
    %17 = arith.mulf %11, %16 : vector<128x32xf32>
    %c0_14 = arith.constant 0 : index
    %c0_15 = arith.constant 0 : index
    %c0_16 = arith.constant 0 : index
    %18 = vector.load %arg7[%c0_14, %c0_15, %c0_16] : memref<2x128x32xf32, #tpu.memory_space<vmem>>, vector<1x128x32xf32>
    %19 = vector.shape_cast %18 : vector<1x128x32xf32> to vector<128x32xf32>
    %20 = vector.shape_cast %17 : vector<128x32xf32> to vector<1x128x32xf32>
    tpu.vector_store %arg7[%c0_14, %c0_15, %c0_16], %20 {strides = array<i32>} : memref<2x128x32xf32, #tpu.memory_space<vmem>>, vector<1x128x32xf32>,
    %c1 = arith.constant 1 : index
    %c0_17 = arith.constant 0 : index
    %c0_18 = arith.constant 0 : index
    %21 = vector.load %arg4[%c1, %c0_17, %c0_18] : memref<2x9x32xbf16, #tpu.memory_space<vmem>>, vector<1x9x32xbf16>
    %22 = vector.shape_cast %21 : vector<1x9x32xbf16> to vector<9x32xbf16>
    %cst_19 = arith.constant dense<0.000000e+00> : vector<128x32xf32>
    %23 = tpu.matmul %13, %22, %cst_19 {dimension_numbers = #tpu.dot_dimension_numbers<[1], [0], [0], [1], [0, 0, 1, 1], [], []>} : vector<128x9xbf16>, vector<9x32xbf16>, vector<128x32xf32> -> vector<128x32xf32>
    %24 = arith.mulf %11, %23 : vector<128x32xf32>
    %c1_20 = arith.constant 1 : index
    %c0_21 = arith.constant 0 : index
    %c0_22 = arith.constant 0 : index
    %25 = vector.load %arg7[%c1_20, %c0_21, %c0_22] : memref<2x128x32xf32, #tpu.memory_space<vmem>>, vector<1x128x32xf32>
    %26 = vector.shape_cast %25 : vector<1x128x32xf32> to vector<128x32xf32>
    %27 = vector.shape_cast %24 : vector<128x32xf32> to vector<1x128x32xf32>
    tpu.vector_store %arg7[%c1_20, %c0_21, %c0_22], %27 {strides = array<i32>} : memref<2x128x32xf32, #tpu.memory_space<vmem>>, vector<1x128x32xf32>,
    return
  }
  func.func @transform_0(%arg0: i32) -> (i32, i32) {
    %c0_i32 = arith.constant 0 : i32
    %c0_i32_0 = arith.constant 0 : i32
    return %arg0, %c0_i32 : i32, i32
  }
  func.func @transform_1(%arg0: i32) -> (i32, i32) {
    %c0_i32 = arith.constant 0 : i32
    %c0_i32_0 = arith.constant 0 : i32
    return %arg0, %c0_i32 : i32, i32
  }
  func.func @transform_2(%arg0: i32) -> (i32, i32) {
    %c0_i32 = arith.constant 0 : i32
    %c0_i32_0 = arith.constant 0 : i32
    %c0_i32_1 = arith.constant 0 : i32
    return %c0_i32, %c0_i32_0 : i32, i32
  }
  func.func @transform_3(%arg0: i32) -> (i32, i32, i32) {
    %c0_i32 = arith.constant 0 : i32
    %c0_i32_0 = arith.constant 0 : i32
    %c0_i32_1 = arith.constant 0 : i32
    %c0_i32_2 = arith.constant 0 : i32
    return %c0_i32, %c0_i32_0, %c0_i32_1 : i32, i32, i32
  }
  func.func @transform_4(%arg0: i32) -> (i32, i32) {
    %c0_i32 = arith.constant 0 : i32
    %c0_i32_0 = arith.constant 0 : i32
    %c0_i32_1 = arith.constant 0 : i32
    return %c0_i32, %c0_i32_0 : i32, i32
  }
  func.func @transform_5(%arg0: i32) -> (i32, i32) {
    %c0_i32 = arith.constant 0 : i32
    %c0_i32_0 = arith.constant 0 : i32
    %c0_i32_1 = arith.constant 0 : i32
    return %c0_i32, %c0_i32_0 : i32, i32
  }
  func.func @transform_6(%arg0: i32) -> (i32, i32, i32) {
    %c0_i32 = arith.constant 0 : i32
    %c0_i32_0 = arith.constant 0 : i32
    %c0_i32_1 = arith.constant 0 : i32
    return %c0_i32, %arg0, %c0_i32_0 : i32, i32, i32
  }
}

module attributes {stable_mosaic.version = 11 : i64} {
  func.func @_vertex_kernel(%arg0: i32, %arg1: memref<2x128x32xf32, #tpu.memory_space<vmem>>, %arg2: memref<2x32x32xbf16, #tpu.memory_space<vmem>>, %arg3: memref<1x32xf32, #tpu.memory_space<vmem>>, %arg4: memref<1x32xf32, #tpu.memory_space<vmem>>, %arg5: memref<128x32xf32, #tpu.memory_space<vmem>>) attributes {dimension_semantics = [#tpu.dimension_semantics<parallel>], iteration_bounds = array<i64: 2>, scalar_prefetch = 0 : i64, scratch_operands = 0 : i64, tpu.core_type = #tpu.core_type<tc>, window_params = [{transform_indices = @transform_0, window_bounds = array<i64: 2, 128, 32>}, {pipeline_mode = #tpu.pipeline_mode<synchronous>, transform_indices = @transform_1, window_bounds = array<i64: 2, 32, 32>}, {pipeline_mode = #tpu.pipeline_mode<synchronous>, transform_indices = @transform_2, window_bounds = array<i64: 1, 32>}, {pipeline_mode = #tpu.pipeline_mode<synchronous>, transform_indices = @transform_3, window_bounds = array<i64: 1, 32>}, {transform_indices = @transform_4, window_bounds = array<i64: 128, 32>}]} {
    %cst = arith.constant 0.000000e+00 : f32
    %0 = vector.broadcast %cst : f32 to vector<128x32xf32>
    %c0 = arith.constant 0 : index
    %c0_0 = arith.constant 0 : index
    %c0_1 = arith.constant 0 : index
    %1 = vector.load %arg1[%c0, %c0_0, %c0_1] : memref<2x128x32xf32, #tpu.memory_space<vmem>>, vector<1x128x32xf32>
    %2 = vector.shape_cast %1 : vector<1x128x32xf32> to vector<128x32xf32>
    %3 = arith.truncf %2 : vector<128x32xf32> to vector<128x32xbf16>
    %c0_2 = arith.constant 0 : index
    %c0_3 = arith.constant 0 : index
    %c0_4 = arith.constant 0 : index
    %4 = vector.load %arg2[%c0_2, %c0_3, %c0_4] : memref<2x32x32xbf16, #tpu.memory_space<vmem>>, vector<1x32x32xbf16>
    %5 = vector.shape_cast %4 : vector<1x32x32xbf16> to vector<32x32xbf16>
    %cst_5 = arith.constant dense<0.000000e+00> : vector<128x32xf32>
    %6 = tpu.matmul %3, %5, %cst_5 {dimension_numbers = #tpu.dot_dimension_numbers<[1], [0], [0], [1], [0, 0, 1, 1], [], []>} : vector<128x32xbf16>, vector<32x32xbf16>, vector<128x32xf32> -> vector<128x32xf32>
    %7 = arith.addf %0, %6 : vector<128x32xf32>
    %c1 = arith.constant 1 : index
    %c0_6 = arith.constant 0 : index
    %c0_7 = arith.constant 0 : index
    %8 = vector.load %arg1[%c1, %c0_6, %c0_7] : memref<2x128x32xf32, #tpu.memory_space<vmem>>, vector<1x128x32xf32>
    %9 = vector.shape_cast %8 : vector<1x128x32xf32> to vector<128x32xf32>
    %10 = arith.truncf %9 : vector<128x32xf32> to vector<128x32xbf16>
    %c1_8 = arith.constant 1 : index
    %c0_9 = arith.constant 0 : index
    %c0_10 = arith.constant 0 : index
    %11 = vector.load %arg2[%c1_8, %c0_9, %c0_10] : memref<2x32x32xbf16, #tpu.memory_space<vmem>>, vector<1x32x32xbf16>
    %12 = vector.shape_cast %11 : vector<1x32x32xbf16> to vector<32x32xbf16>
    %cst_11 = arith.constant dense<0.000000e+00> : vector<128x32xf32>
    %13 = tpu.matmul %10, %12, %cst_11 {dimension_numbers = #tpu.dot_dimension_numbers<[1], [0], [0], [1], [0, 0, 1, 1], [], []>} : vector<128x32xbf16>, vector<32x32xbf16>, vector<128x32xf32> -> vector<128x32xf32>
    %14 = arith.addf %7, %13 : vector<128x32xf32>
    %c0_12 = arith.constant 0 : index
    %c0_13 = arith.constant 0 : index
    %15 = vector.load %arg3[%c0_12, %c0_13] : memref<1x32xf32, #tpu.memory_space<vmem>>, vector<1x32xf32>
    %16 = vector.broadcast %15 : vector<1x32xf32> to vector<128x32xf32>
    %17 = arith.mulf %14, %16 : vector<128x32xf32>
    %c0_14 = arith.constant 0 : index
    %c0_15 = arith.constant 0 : index
    %18 = vector.load %arg4[%c0_14, %c0_15] : memref<1x32xf32, #tpu.memory_space<vmem>>, vector<1x32xf32>
    %19 = vector.broadcast %18 : vector<1x32xf32> to vector<128x32xf32>
    %20 = arith.addf %17, %19 : vector<128x32xf32>
    %cst_16 = arith.constant 0.000000e+00 : f32
    %21 = vector.broadcast %cst_16 : f32 to vector<128x32xf32>
    %22 = arith.maximumf %20, %21 : vector<128x32xf32>
    %c0_17 = arith.constant 0 : index
    %c0_18 = arith.constant 0 : index
    %23 = vector.load %arg5[%c0_17, %c0_18] : memref<128x32xf32, #tpu.memory_space<vmem>>, vector<128x32xf32>
    tpu.vector_store %arg5[%c0_17, %c0_18], %22 {strides = array<i32>} : memref<128x32xf32, #tpu.memory_space<vmem>>, vector<128x32xf32>,
    return
  }
  func.func @transform_0(%arg0: i32) -> (i32, i32, i32) {
    %c0_i32 = arith.constant 0 : i32
    %c0_i32_0 = arith.constant 0 : i32
    %c0_i32_1 = arith.constant 0 : i32
    return %c0_i32, %arg0, %c0_i32_0 : i32, i32, i32
  }
  func.func @transform_1(%arg0: i32) -> (i32, i32, i32) {
    %c0_i32 = arith.constant 0 : i32
    %c0_i32_0 = arith.constant 0 : i32
    %c0_i32_1 = arith.constant 0 : i32
    %c0_i32_2 = arith.constant 0 : i32
    return %c0_i32, %c0_i32_0, %c0_i32_1 : i32, i32, i32
  }
  func.func @transform_2(%arg0: i32) -> (i32, i32) {
    %c0_i32 = arith.constant 0 : i32
    %c0_i32_0 = arith.constant 0 : i32
    %c0_i32_1 = arith.constant 0 : i32
    return %c0_i32, %c0_i32_0 : i32, i32
  }
  func.func @transform_3(%arg0: i32) -> (i32, i32) {
    %c0_i32 = arith.constant 0 : i32
    %c0_i32_0 = arith.constant 0 : i32
    %c0_i32_1 = arith.constant 0 : i32
    return %c0_i32, %c0_i32_0 : i32, i32
  }
  func.func @transform_4(%arg0: i32) -> (i32, i32) {
    %c0_i32 = arith.constant 0 : i32
    %c0_i32_0 = arith.constant 0 : i32
    return %arg0, %c0_i32 : i32, i32
  }
}

</mosaic_0001>

<llo_original>
// kernel: first_block_forward.2
$region0: #{first_block_forward.2}
  #allocation0 [shape = 'u32[]', space=smem, size = 0x4, offset = 0x4, fixed_abs, tag = 'smem constant byte address 0x4 - core index']
  #allocation1 [shape = 'u32[144,128]{1,0:T(1,128)}', space=vmem, size = 0x12000, scoped, tag = 'internal scratch']
  %s0 = inlined_call_operand.vmem [shape: f32[512,6], index: 0, kind: input, shape index: {}]
  %s1 = inlined_call_operand.vmem [shape: f32[512,9], index: 1, kind: input, shape index: {}]
  %s2 = inlined_call_operand.vmem [shape: bf16[6,32], index: 2, kind: input, shape index: {}]
  %s3 = inlined_call_operand.vmem [shape: bf16[2,9,32], index: 3, kind: input, shape index: {}]
  %s4 = inlined_call_operand.vmem [shape: f32[1,32], index: 4, kind: input, shape index: {}]
  %s5 = inlined_call_operand.vmem [shape: f32[1,32], index: 5, kind: input, shape index: {}]
  %s6 = inlined_call_operand.vmem [shape: f32[2,512,32], index: 6, kind: output, shape index: {}]
  %s7 = sld [smem:[#allocation0]]
  $region91: #{first_block_forward.2} parent=0
    _
  %s9 = ssub.s32 1, %s7
  %s10 = scalar_select 0, %s9, %s7
  $region1: #{first_block_forward.2} parent=0
    #allocation2 [shape = 'u8[262144]{0}', space=vmem, size = 0x40000, scoped, tag = 'output window, operand 0']
    loop: start=0, step=1, limit=6
    $region2: #{first_block_forward.2} parent=1 // loop_pre_header
      _
    $region3: #{first_block_forward.2} parent=1 // loop_header
      %s12 = sphi 0, %s16
      %p13 = scmp.ge.s32.totalorder %s12, 6
      %s22 = sphi 0, %s24
      %s25 = sphi 0, %s22
      %s26 = sphi 0, %s25
      %s42 = sphi 0, %s26
      %s48 = sphi 0, %s50
      %s51 = sphi 0, %s48
      %s52 = sphi 0, %s51
      %s68 = sphi 0, %s52
      %s72 = sphi 0, %s72
      %s74 = sphi 0, %s72
      %s75 = sphi 0, %s74
      %s89 = sphi 0, %s75
      %s93 = sphi 0, %s93
      %s95 = sphi 0, %s93
      %s96 = sphi 0, %s95
      %s110 = sphi 0, %s96
      %s114 = sphi 0, %s114
      %s116 = sphi 0, %s114
      %s117 = sphi 0, %s116
      %s131 = sphi 0, %s117
      %s135 = sphi 0, %s135
      %s137 = sphi 0, %s135
      %s138 = sphi 0, %s137
      %s152 = sphi 0, %s138
      %s158 = sphi 0, %s160
      %s161 = sphi 0, %s158
      %s162 = sphi 0, %s161
      %s178 = sphi 0, %s162
    $region4: #{first_block_forward.2} parent=1 // loop_header_branch
      %15 = sbr.rel (%p13) target = $region8
    $region5: #{first_block_forward.2} parent=1 // loop_body
      %s17 = ssub.s32 %s12, 1
      %s18 = ssub.s32 %s12, 2
      %s19 = sadd.s32 %s12, 1
      %s20 = ssub.s32 %s12, %s19
      %p21 = scmp.eq.s32.totalorder %s20, 0
      %s23 = sadd.s32 %s22, 1
      %s24 = scalar_select %p21, %s22, %s23
      %p27 = pneg %p21
      %p28 = scmp.eq.s32.totalorder %s12, 3
      %p29 = por %p27, %p28
      %p30 = scmp.ne.s32.totalorder %s22, %s25
      %p31 = scmp.eq.s32.totalorder %s12, 0
      %p32 = por %p30, %p31
      %p33 = scmp.ne.s32.totalorder %s22, %s25
      %p34 = scmp.eq.s32.totalorder %s17, 3
      %p35 = por %p33, %p34
      %p36 = scmp.ne.s32.totalorder %s25, %s26
      %p37 = scmp.eq.s32.totalorder %s17, 0
      %p38 = por %p36, %p37
      %p39 = scmp.ne.s32.totalorder %s25, %s26
      %p40 = scmp.eq.s32.totalorder %s18, 3
      %p41 = por %p39, %p40
      %p43 = scmp.ne.s32.totalorder %s26, %s42
      %p44 = scmp.eq.s32.totalorder %s18, 0
      %p45 = por %p43, %p44
      %s46 = ssub.s32 %s12, %s19
      %p47 = scmp.eq.s32.totalorder %s46, 0
      %s49 = sadd.s32 %s48, 1
      %s50 = scalar_select %p47, %s48, %s49
      %p53 = pneg %p47
      %p54 = scmp.eq.s32.totalorder %s12, 3
      %p55 = por %p53, %p54
      %p56 = scmp.ne.s32.totalorder %s48, %s51
      %p57 = scmp.eq.s32.totalorder %s12, 0
      %p58 = por %p56, %p57
      %p59 = scmp.ne.s32.totalorder %s48, %s51
      %p60 = scmp.eq.s32.totalorder %s17, 3
      %p61 = por %p59, %p60
      %p62 = scmp.ne.s32.totalorder %s51, %s52
      %p63 = scmp.eq.s32.totalorder %s17, 0
      %p64 = por %p62, %p63
      %p65 = scmp.ne.s32.totalorder %s51, %s52
      %p66 = scmp.eq.s32.totalorder %s18, 3
      %p67 = por %p65, %p66
      %p69 = scmp.ne.s32.totalorder %s52, %s68
      %p70 = scmp.eq.s32.totalorder %s18, 0
      %p71 = por %p69, %p70
      %s73 = sadd.s32 %s72, 1
      %p76 = scmp.eq.s32.totalorder %s12, 3
      %p77 = scmp.ne.s32.totalorder %s72, %s74
      %p78 = scmp.eq.s32.totalorder %s12, 0
      %p79 = por %p77, %p78
      %p80 = scmp.ne.s32.totalorder %s72, %s74
      %p81 = scmp.eq.s32.totalorder %s17, 3
      %p82 = por %p80, %p81
      %p83 = scmp.ne.s32.totalorder %s74, %s75
      %p84 = scmp.eq.s32.totalorder %s17, 0
      %p85 = por %p83, %p84
      %p86 = scmp.ne.s32.totalorder %s74, %s75
      %p87 = scmp.eq.s32.totalorder %s18, 3
      %p88 = por %p86, %p87
      %p90 = scmp.ne.s32.totalorder %s75, %s89
      %p91 = scmp.eq.s32.totalorder %s18, 0
      %p92 = por %p90, %p91
      %s94 = sadd.s32 %s93, 1
      %p97 = scmp.eq.s32.totalorder %s12, 3
      %p98 = scmp.ne.s32.totalorder %s93, %s95
      %p99 = scmp.eq.s32.totalorder %s12, 0
      %p100 = por %p98, %p99
      %p101 = scmp.ne.s32.totalorder %s93, %s95
      %p102 = scmp.eq.s32.totalorder %s17, 3
      %p103 = por %p101, %p102
      %p104 = scmp.ne.s32.totalorder %s95, %s96
      %p105 = scmp.eq.s32.totalorder %s17, 0
      %p106 = por %p104, %p105
      %p107 = scmp.ne.s32.totalorder %s95, %s96
      %p108 = scmp.eq.s32.totalorder %s18, 3
      %p109 = por %p107, %p108
      %p111 = scmp.ne.s32.totalorder %s96, %s110
      %p112 = scmp.eq.s32.totalorder %s18, 0
      %p113 = por %p111, %p112
      %s115 = sadd.s32 %s114, 1
      %p118 = scmp.eq.s32.totalorder %s12, 3
      %p119 = scmp.ne.s32.totalorder %s114, %s116
      %p120 = scmp.eq.s32.totalorder %s12, 0
      %p121 = por %p119, %p120
      %p122 = scmp.ne.s32.totalorder %s114, %s116
      %p123 = scmp.eq.s32.totalorder %s17, 3
      %p124 = por %p122, %p123
      %p125 = scmp.ne.s32.totalorder %s116, %s117
      %p126 = scmp.eq.s32.totalorder %s17, 0
      %p127 = por %p125, %p126
      %p128 = scmp.ne.s32.totalorder %s116, %s117
      %p129 = scmp.eq.s32.totalorder %s18, 3
      %p130 = por %p128, %p129
      %p132 = scmp.ne.s32.totalorder %s117, %s131
      %p133 = scmp.eq.s32.totalorder %s18, 0
      %p134 = por %p132, %p133
      %s136 = sadd.s32 %s135, 1
      %p139 = scmp.eq.s32.totalorder %s12, 3
      %p140 = scmp.ne.s32.totalorder %s135, %s137
      %p141 = scmp.eq.s32.totalorder %s12, 0
      %p142 = por %p140, %p141
      %p143 = scmp.ne.s32.totalorder %s135, %s137
      %p144 = scmp.eq.s32.totalorder %s17, 3
      %p145 = por %p143, %p144
      %p146 = scmp.ne.s32.totalorder %s137, %s138
      %p147 = scmp.eq.s32.totalorder %s17, 0
      %p148 = por %p146, %p147
      %p149 = scmp.ne.s32.totalorder %s137, %s138
      %p150 = scmp.eq.s32.totalorder %s18, 3
      %p151 = por %p149, %p150
      %p153 = scmp.ne.s32.totalorder %s138, %s152
      %p154 = scmp.eq.s32.totalorder %s18, 0
      %p155 = por %p153, %p154
      %s156 = ssub.s32 %s12, %s19
      %p157 = scmp.eq.s32.totalorder %s156, 0
      %s159 = sadd.s32 %s158, 1
      %s160 = scalar_select %p157, %s158, %s159
      %p163 = pneg %p157
      %p164 = scmp.eq.s32.totalorder %s12, 3
      %p165 = por %p163, %p164
      %p166 = scmp.ne.s32.totalorder %s158, %s161
      %p167 = scmp.eq.s32.totalorder %s12, 0
      %p168 = por %p166, %p167
      %p169 = scmp.ne.s32.totalorder %s158, %s161
      %p170 = scmp.eq.s32.totalorder %s17, 3
      %p171 = por %p169, %p170
      %p172 = scmp.ne.s32.totalorder %s161, %s162
      %p173 = scmp.eq.s32.totalorder %s17, 0
      %p174 = por %p172, %p173
      %p175 = scmp.ne.s32.totalorder %s161, %s162
      %p176 = scmp.eq.s32.totalorder %s18, 3
      %p177 = por %p175, %p176
      %p179 = scmp.ne.s32.totalorder %s162, %s178
      %p180 = scmp.eq.s32.totalorder %s18, 0
      %p181 = por %p179, %p180
      %p182 = scmp.le.s32.totalorder 1, %s12
      %p183 = scmp.lt.s32.totalorder %s12, 5
      %p184 = pnand %p182, %p183
      %p185 = pneg %p184
      // Predicated region
      $region9: #{first_block_forward.2} parent=5 // pred_check
        _
      $region10: #{first_block_forward.2} parent=5 // pred_check_branch
        %187 = sbr.rel (%p184) target = $region12
      $region11: #{first_block_forward.2} parent=5 // pred_region
        %s188 = ssub.s32 %s12, 1
        // Predicated region
        $region13: #{first_block_forward.2} parent=11 // pred_check
          %p189 = pneg %p85
        $region14: #{first_block_forward.2} parent=11 // pred_check_branch
          %191 = sbr.rel (%p189) target = $region16
        $region15: #{first_block_forward.2} parent=11 // pred_region
          _
        $region16: #{first_block_forward.2} parent=11 // pred_fallthru
          _
        // Predicated region
        $region17: #{first_block_forward.2} parent=11 // pred_check
          %p192 = pneg %p106
        $region18: #{first_block_forward.2} parent=11 // pred_check_branch
          %194 = sbr.rel (%p192) target = $region20
        $region19: #{first_block_forward.2} parent=11 // pred_region
          _
        $region20: #{first_block_forward.2} parent=11 // pred_fallthru
          _
        // Predicated region
        $region21: #{first_block_forward.2} parent=11 // pred_check
          %p195 = pneg %p127
        $region22: #{first_block_forward.2} parent=11 // pred_check_branch
          %197 = sbr.rel (%p195) target = $region24
        $region23: #{first_block_forward.2} parent=11 // pred_region
          _
        $region24: #{first_block_forward.2} parent=11 // pred_fallthru
          _
        // Predicated region
        $region25: #{first_block_forward.2} parent=11 // pred_check
          %p198 = pneg %p148
        $region26: #{first_block_forward.2} parent=11 // pred_check_branch
          %200 = sbr.rel (%p198) target = $region28
        $region27: #{first_block_forward.2} parent=11 // pred_region
          _
        $region28: #{first_block_forward.2} parent=11 // pred_fallthru
          _
      $region12: #{first_block_forward.2} parent=5 // pred_fallthru
        _
      %p201 = scmp.lt.s32.totalorder %s12, 4
      // Predicated region
      $region29: #{first_block_forward.2} parent=5 // pred_check
        %p202 = pneg %p201
      $region30: #{first_block_forward.2} parent=5 // pred_check_branch
        %204 = sbr.rel (%p202) target = $region32
      $region31: #{first_block_forward.2} parent=5 // pred_region
        // Predicated region
        $region33: #{first_block_forward.2} parent=31 // pred_check
          %p205 = pneg %p32
        $region34: #{first_block_forward.2} parent=31 // pred_check_branch
          %207 = sbr.rel (%p205) target = $region36
        $region35: #{first_block_forward.2} parent=31 // pred_region
          %s208 = smul.u32 16, %s12
          %p209 = scmp.lt.s32.totalorder %s208, 63
          %s210 = scalar_select %p209, %s208, 63
          %s211 = smul.addr %s210, 8
          %s212 = scalar_lea.vmem %s0, %s211
          %s213 = smul.u32 16, %s12
        $region36: #{first_block_forward.2} parent=31 // pred_fallthru
          _
        // Predicated region
        $region37: #{first_block_forward.2} parent=31 // pred_check
          %p214 = pneg %p58
        $region38: #{first_block_forward.2} parent=31 // pred_check_branch
          %216 = sbr.rel (%p214) target = $region40
        $region39: #{first_block_forward.2} parent=31 // pred_region
          %s217 = smul.u32 16, %s12
          %p218 = scmp.lt.s32.totalorder %s217, 63
          %s219 = scalar_select %p218, %s217, 63
          %s220 = smul.addr %s219, 8
          %s221 = scalar_lea.vmem %s1, %s220
          %s222 = smul.u32 16, %s12
        $region40: #{first_block_forward.2} parent=31 // pred_fallthru
          _
      $region32: #{first_block_forward.2} parent=5 // pred_fallthru
        _
      %p223 = scmp.le.s32.totalorder 1, %s12
      %p224 = scmp.lt.s32.totalorder %s12, 5
      %p225 = pnand %p223, %p224
      %p226 = pneg %p225
      // Predicated region
      $region41: #{first_block_forward.2} parent=5 // pred_check
        _
      $region42: #{first_block_forward.2} parent=5 // pred_check_branch
        %228 = sbr.rel (%p225) target = $region44
      $region43: #{first_block_forward.2} parent=5 // pred_region
        %s229 = ssub.s32 %s12, 1
        %s230 = smul.u32 16, %s17
        %p231 = scmp.lt.s32.totalorder %s230, 63
        %s232 = scalar_select %p231, %s230, 63
        %s233 = smul.addr %s232, 8
        %s234 = scalar_lea.vmem %s0, %s233
        %p235 = pneg %p38
        %p236 = pneg %p35
        %s237 = smul.u32 16, %s17
        %p238 = scmp.lt.s32.totalorder %s237, 63
        %s239 = scalar_select %p238, %s237, 63
        %s240 = smul.addr %s239, 8
        %s241 = scalar_lea.vmem %s1, %s240
        %p242 = pneg %p64
        %p243 = pneg %p61
        %p244 = pneg %p85
        %p245 = pneg %p82
        %p246 = pneg %p106
        %p247 = pneg %p103
        %p248 = pneg %p127
        %p249 = pneg %p124
        %p250 = pneg %p148
        %p251 = pneg %p145
        %p252 = pneg %p174
        %p253 = pneg %p171
        %s254 = sand.u32 %s161, 1
        %s255 = sand.u32 %s161, 1
        %s256 = smul.addr %s255, 256
        %s257 = scalar_lea.vmem [#allocation2], %s256
        %s258 = smul.u32 16, %s17
        %p259 = scmp.lt.s32.totalorder %s258, 63
        %s260 = scalar_select %p259, %s258, 63
        %s261 = smul.addr %s260, 8
        %s262 = scalar_lea.vmem %s0, %s261
        %s263 = smul.u32 16, %s17
        %s264 = smul.u32 16, %s17
        %p265 = scmp.lt.s32.totalorder %s264, 63
        %s266 = scalar_select %p265, %s264, 63
        %s267 = smul.addr %s266, 8
        %s268 = scalar_lea.vmem %s1, %s267
        %s269 = smul.u32 16, %s17
        %s270 = smul.u32 16, %s17
        %v272 = vld [vmem:[%s262] sm:$0xff]
        %v273 = vld [vmem:[%s262 + $0x8] sm:$0xff]
        %v274 = vld [vmem:[%s262 + $0x10] sm:$0xff]
        %v275 = vld [vmem:[%s262 + $0x18] sm:$0xff]
        %v276 = vld [vmem:[%s262 + $0x20] sm:$0xff]
        %v277 = vld [vmem:[%s262 + $0x28] sm:$0xff]
        %v278 = vld [vmem:[%s262 + $0x30] sm:$0xff]
        %v279 = vld [vmem:[%s262 + $0x38] sm:$0xff]
        %v280 = vld [vmem:[%s262 + $0x40] sm:$0xff]
        %v281 = vld [vmem:[%s262 + $0x48] sm:$0xff]
        %v282 = vld [vmem:[%s262 + $0x50] sm:$0xff]
        %v283 = vld [vmem:[%s262 + $0x58] sm:$0xff]
        %v284 = vld [vmem:[%s262 + $0x60] sm:$0xff]
        %v285 = vld [vmem:[%s262 + $0x68] sm:$0xff]
        %v286 = vld [vmem:[%s262 + $0x70] sm:$0xff]
        %v287 = vld [vmem:[%s262 + $0x78] sm:$0xff]
        %v288 = vpack.c.bf16 %v273, %v272
        %v289 = vpack.c.bf16 %v275, %v274
        %v290 = vpack.c.bf16 %v277, %v276
        %v291 = vpack.c.bf16 %v279, %v278
        %v292 = vpack.c.bf16 %v281, %v280
        %v293 = vpack.c.bf16 %v283, %v282
        %v294 = vpack.c.bf16 %v285, %v284
        %v295 = vpack.c.bf16 %v287, %v286
        %v296 = vld [vmem:[%s2] sm:$0x7]
        %vm297 = vcmask 48128
        %v299 = vsel %vm297, %v288, 0
        %v302 = vsel %vm297, %v289, 0
        %v305 = vsel %vm297, %v290, 0
        %v308 = vsel %vm297, %v291, 0
        %v311 = vsel %vm297, %v292, 0
        %v314 = vsel %vm297, %v293, 0
        %v317 = vsel %vm297, %v294, 0
        %v320 = vsel %vm297, %v295, 0
        %vm322 = vcmask 1042432
        %v324 = vsel %vm322, %v296, 0
        %326 = vmatprep.subr.bf16.mxu0 0
        %327 = vmatpush1.bf16.msra.mxu0 0
        %328 = vmatprep.subr.bf16.mxu0 0
        %329 = vmatpush1.bf16.msra.mxu0 0
        %330 = vmatprep.subr.bf16.mxu0 0
        %331 = vmatpush1.bf16.msra.mxu0 0
        %332 = vmatprep.subr.bf16.mxu0 0
        %333 = vmatpush1.bf16.msra.mxu0 0
        %334 = vmatprep.subr.bf16.mxu0 0
        %335 = vmatpush1.bf16.msra.mxu0 0
        %336 = vmatprep.subr.bf16.mxu0 0
        %337 = vmatpush1.bf16.msra.mxu0 0
        %338 = vmatprep.subr.bf16.mxu0 0
        %339 = vmatpush1.bf16.msra.mxu0 0
        %340 = vmatprep.subr.bf16.mxu0 0
        %341 = vmatpush1.bf16.msra.mxu0 %v324
        %342 = vmatprep.subr.bf16.mxu0 0
        %343 = vmatpush2.bf16.msra.mxu0 0
        %344 = vmatprep.subr.bf16.mxu0 0
        %345 = vmatpush2.bf16.msra.mxu0 0
        %346 = vmatprep.subr.bf16.mxu0 0
        %347 = vmatpush2.bf16.msra.mxu0 0
        %348 = vmatprep.subr.bf16.mxu0 0
        %349 = vmatpush2.bf16.msra.mxu0 0
        %350 = vmatprep.subr.bf16.mxu0 0
        %351 = vmatpush2.bf16.msra.mxu0 0
        %352 = vmatprep.subr.bf16.mxu0 0
        %353 = vmatpush2.bf16.msra.mxu0 0
        %354 = vmatprep.subr.bf16.mxu0 0
        %355 = vmatpush2.bf16.msra.mxu0 0
        %356 = vmatprep.subr.bf16.mxu0 0
        %357 = vmatpush2.bf16.msra.mxu0 0
        %358 = vmatprep.mubr.bf16.mxu0 0
        %359 = vmatmul.mubr.bf16.gmra.mxu0 %v299
        %v360 = vpop.f32.mrf.mxu0
        %v361 = vadd.f32 0.0, %v360
        %v362 = vpop.f32.mrf.mxu0
        %v363 = vpop.f32.mrf.mxu0
        %v364 = vadd.f32 0.0, %v363
        %v365 = vpop.f32.mrf.mxu0
        %366 = vmatprep.mubr.bf16.mxu0 0
        %367 = vmatmul.mubr.bf16.gmra.mxu0 %v302
        %v368 = vpop.f32.mrf.mxu0
        %v369 = vadd.f32 0.0, %v368
        %v370 = vpop.f32.mrf.mxu0
        %v371 = vpop.f32.mrf.mxu0
        %v372 = vadd.f32 0.0, %v371
        %v373 = vpop.f32.mrf.mxu0
        %374 = vmatprep.mubr.bf16.mxu0 0
        %375 = vmatmul.mubr.bf16.gmra.mxu0 %v305
        %v376 = vpop.f32.mrf.mxu0
        %v377 = vadd.f32 0.0, %v376
        %v378 = vpop.f32.mrf.mxu0
        %v379 = vpop.f32.mrf.mxu0
        %v380 = vadd.f32 0.0, %v379
        %v381 = vpop.f32.mrf.mxu0
        %382 = vmatprep.mubr.bf16.mxu0 0
        %383 = vmatmul.mubr.bf16.gmra.mxu0 %v308
        %v384 = vpop.f32.mrf.mxu0
        %v385 = vadd.f32 0.0, %v384
        %v386 = vpop.f32.mrf.mxu0
        %v387 = vpop.f32.mrf.mxu0
        %v388 = vadd.f32 0.0, %v387
        %v389 = vpop.f32.mrf.mxu0
        %390 = vmatprep.mubr.bf16.mxu0 0
        %391 = vmatmul.mubr.bf16.gmra.mxu0 %v311
        %v392 = vpop.f32.mrf.mxu0
        %v393 = vadd.f32 0.0, %v392
        %v394 = vpop.f32.mrf.mxu0
        %v395 = vpop.f32.mrf.mxu0
        %v396 = vadd.f32 0.0, %v395
        %v397 = vpop.f32.mrf.mxu0
        %398 = vmatprep.mubr.bf16.mxu0 0
        %399 = vmatmul.mubr.bf16.gmra.mxu0 %v314
        %v400 = vpop.f32.mrf.mxu0
        %v401 = vadd.f32 0.0, %v400
        %v402 = vpop.f32.mrf.mxu0
        %v403 = vpop.f32.mrf.mxu0
        %v404 = vadd.f32 0.0, %v403
        %v405 = vpop.f32.mrf.mxu0
        %406 = vmatprep.mubr.bf16.mxu0 0
        %407 = vmatmul.mubr.bf16.gmra.mxu0 %v317
        %v408 = vpop.f32.mrf.mxu0
        %v409 = vadd.f32 0.0, %v408
        %v410 = vpop.f32.mrf.mxu0
        %v411 = vpop.f32.mrf.mxu0
        %v412 = vadd.f32 0.0, %v411
        %v413 = vpop.f32.mrf.mxu0
        %414 = vmatprep.mubr.bf16.mxu0 0
        %415 = vmatmul.mubr.bf16.gmra.mxu0 %v320
        %v416 = vpop.f32.mrf.mxu0
        %v417 = vadd.f32 0.0, %v416
        %v418 = vpop.f32.mrf.mxu0
        %v419 = vpop.f32.mrf.mxu0
        %v420 = vadd.f32 0.0, %v419
        %v421 = vpop.f32.mrf.mxu0
        %422 = vdwg.mxu0
        %v423 = vld [vmem:[%s4] sm:$0x1]
        %v425 = vlaneseq
        %v426 = vshrl.u32 %v425, 7
        %v427 = vsub.s32 0, %v426
        %v428 = vrot.slane %v423, %v427
        %v430 = vmul.f32 %v361, %v428
        %v431 = vmul.f32 %v364, %v428
        %v432 = vmul.f32 %v369, %v428
        %v433 = vmul.f32 %v372, %v428
        %v434 = vmul.f32 %v377, %v428
        %v435 = vmul.f32 %v380, %v428
        %v436 = vmul.f32 %v385, %v428
        %v437 = vmul.f32 %v388, %v428
        %v438 = vmul.f32 %v393, %v428
        %v439 = vmul.f32 %v396, %v428
        %v440 = vmul.f32 %v401, %v428
        %v441 = vmul.f32 %v404, %v428
        %v442 = vmul.f32 %v409, %v428
        %v443 = vmul.f32 %v412, %v428
        %v444 = vmul.f32 %v417, %v428
        %v445 = vmul.f32 %v420, %v428
        %v446 = vld [vmem:[%s5] sm:$0x1]
        %v448 = vlaneseq
        %v449 = vshrl.u32 %v448, 7
        %v450 = vsub.s32 0, %v449
        %v451 = vrot.slane %v446, %v450
        %v453 = vadd.f32 %v430, %v451
        %v454 = vadd.f32 %v431, %v451
        %v455 = vadd.f32 %v432, %v451
        %v456 = vadd.f32 %v433, %v451
        %v457 = vadd.f32 %v434, %v451
        %v458 = vadd.f32 %v435, %v451
        %v459 = vadd.f32 %v436, %v451
        %v460 = vadd.f32 %v437, %v451
        %v461 = vadd.f32 %v438, %v451
        %v462 = vadd.f32 %v439, %v451
        %v463 = vadd.f32 %v440, %v451
        %v464 = vadd.f32 %v441, %v451
        %v465 = vadd.f32 %v442, %v451
        %v466 = vadd.f32 %v443, %v451
        %v467 = vadd.f32 %v444, %v451
        %v468 = vadd.f32 %v445, %v451
        %v469 = vmax.f32 %v453, 0.0
        %v470 = vmax.f32 %v454, 0.0
        %v471 = vmax.f32 %v455, 0.0
        %v472 = vmax.f32 %v456, 0.0
        %v473 = vmax.f32 %v457, 0.0
        %v474 = vmax.f32 %v458, 0.0
        %v475 = vmax.f32 %v459, 0.0
        %v476 = vmax.f32 %v460, 0.0
        %v477 = vmax.f32 %v461, 0.0
        %v478 = vmax.f32 %v462, 0.0
        %v479 = vmax.f32 %v463, 0.0
        %v480 = vmax.f32 %v464, 0.0
        %v481 = vmax.f32 %v465, 0.0
        %v482 = vmax.f32 %v466, 0.0
        %v483 = vmax.f32 %v467, 0.0
        %v484 = vmax.f32 %v468, 0.0
        %v485 = vld [vmem:[%s268] sm:$0xff]
        %v486 = vld [vmem:[%s268 + $0x8] sm:$0xff]
        %v487 = vld [vmem:[%s268 + $0x10] sm:$0xff]
        %v488 = vld [vmem:[%s268 + $0x18] sm:$0xff]
        %v489 = vld [vmem:[%s268 + $0x20] sm:$0xff]
        %v490 = vld [vmem:[%s268 + $0x28] sm:$0xff]
        %v491 = vld [vmem:[%s268 + $0x30] sm:$0xff]
        %v492 = vld [vmem:[%s268 + $0x38] sm:$0xff]
        %v493 = vld [vmem:[%s268 + $0x40] sm:$0xff]
        %v494 = vld [vmem:[%s268 + $0x48] sm:$0xff]
        %v495 = vld [vmem:[%s268 + $0x50] sm:$0xff]
        %v496 = vld [vmem:[%s268 + $0x58] sm:$0xff]
        %v497 = vld [vmem:[%s268 + $0x60] sm:$0xff]
        %v498 = vld [vmem:[%s268 + $0x68] sm:$0xff]
        %v499 = vld [vmem:[%s268 + $0x70] sm:$0xff]
        %v500 = vld [vmem:[%s268 + $0x78] sm:$0xff]
        %v501 = vpack.c.bf16 %v486, %v485
        %v502 = vpack.c.bf16 %v488, %v487
        %v503 = vpack.c.bf16 %v490, %v489
        %v504 = vpack.c.bf16 %v492, %v491
        %v505 = vpack.c.bf16 %v494, %v493
        %v506 = vpack.c.bf16 %v496, %v495
        %v507 = vpack.c.bf16 %v498, %v497
        %v508 = vpack.c.bf16 %v500, %v499
        %v509 = vld [vmem:[%s3] sm:$0xf]
        %v510 = vld [vmem:[%s3 + $0x4] sm:$0x1]
        %v513 = vunpack.c.l.b16 %v509
        %v514 = vunpack.c.l.b16 %v510
        %v515 = vpack.c.b16 %v514, %v513
        %vm516 = vcmask 72704
        %v518 = vsel %vm516, %v501, 0
        %v521 = vsel %vm516, %v502, 0
        %v524 = vsel %vm516, %v503, 0
        %v527 = vsel %vm516, %v504, 0
        %v530 = vsel %vm516, %v505, 0
        %v533 = vsel %vm516, %v506, 0
        %v536 = vsel %vm516, %v507, 0
        %v539 = vsel %vm516, %v508, 0
        %vm541 = vcmask 1043456
        %vm542 = vcmask 1044480
        %v543 = vsel %vm541, 4294967295, 65535
        %v544 = vsel %vm542, %v543, 0
        %v546 = vand.u32 %v515, %v544
        %548 = vmatprep.subr.bf16.mxu0 0
        %549 = vmatpush1.bf16.msra.mxu0 0
        %550 = vmatprep.subr.bf16.mxu0 0
        %551 = vmatpush1.bf16.msra.mxu0 0
        %552 = vmatprep.subr.bf16.mxu0 0
        %553 = vmatpush1.bf16.msra.mxu0 0
        %554 = vmatprep.subr.bf16.mxu0 0
        %555 = vmatpush1.bf16.msra.mxu0 0
        %556 = vmatprep.subr.bf16.mxu0 0
        %557 = vmatpush1.bf16.msra.mxu0 0
        %558 = vmatprep.subr.bf16.mxu0 0
        %559 = vmatpush1.bf16.msra.mxu0 0
        %560 = vmatprep.subr.bf16.mxu0 0
        %561 = vmatpush1.bf16.msra.mxu0 0
        %562 = vmatprep.subr.bf16.mxu0 0
        %563 = vmatpush1.bf16.msra.mxu0 %v546
        %564 = vmatprep.subr.bf16.mxu0 0
        %565 = vmatpush2.bf16.msra.mxu0 0
        %566 = vmatprep.subr.bf16.mxu0 0
        %567 = vmatpush2.bf16.msra.mxu0 0
        %568 = vmatprep.subr.bf16.mxu0 0
        %569 = vmatpush2.bf16.msra.mxu0 0
        %570 = vmatprep.subr.bf16.mxu0 0
        %571 = vmatpush2.bf16.msra.mxu0 0
        %572 = vmatprep.subr.bf16.mxu0 0
        %573 = vmatpush2.bf16.msra.mxu0 0
        %574 = vmatprep.subr.bf16.mxu0 0
        %575 = vmatpush2.bf16.msra.mxu0 0
        %576 = vmatprep.subr.bf16.mxu0 0
        %577 = vmatpush2.bf16.msra.mxu0 0
        %578 = vmatprep.subr.bf16.mxu0 0
        %579 = vmatpush2.bf16.msra.mxu0 0
        %580 = vmatprep.mubr.bf16.mxu0 0
        %581 = vmatmul.mubr.bf16.gmra.mxu0 %v518
        %v582 = vpop.f32.mrf.mxu0
        %v583 = vadd.f32 0.0, %v582
        %v584 = vpop.f32.mrf.mxu0
        %v585 = vpop.f32.mrf.mxu0
        %v586 = vadd.f32 0.0, %v585
        %v587 = vpop.f32.mrf.mxu0
        %588 = vmatprep.mubr.bf16.mxu0 0
        %589 = vmatmul.mubr.bf16.gmra.mxu0 %v521
        %v590 = vpop.f32.mrf.mxu0
        %v591 = vadd.f32 0.0, %v590
        %v592 = vpop.f32.mrf.mxu0
        %v593 = vpop.f32.mrf.mxu0
        %v594 = vadd.f32 0.0, %v593
        %v595 = vpop.f32.mrf.mxu0
        %596 = vmatprep.mubr.bf16.mxu0 0
        %597 = vmatmul.mubr.bf16.gmra.mxu0 %v524
        %v598 = vpop.f32.mrf.mxu0
        %v599 = vadd.f32 0.0, %v598
        %v600 = vpop.f32.mrf.mxu0
        %v601 = vpop.f32.mrf.mxu0
        %v602 = vadd.f32 0.0, %v601
        %v603 = vpop.f32.mrf.mxu0
        %604 = vmatprep.mubr.bf16.mxu0 0
        %605 = vmatmul.mubr.bf16.gmra.mxu0 %v527
        %v606 = vpop.f32.mrf.mxu0
        %v607 = vadd.f32 0.0, %v606
        %v608 = vpop.f32.mrf.mxu0
        %v609 = vpop.f32.mrf.mxu0
        %v610 = vadd.f32 0.0, %v609
        %v611 = vpop.f32.mrf.mxu0
        %612 = vmatprep.mubr.bf16.mxu0 0
        %613 = vmatmul.mubr.bf16.gmra.mxu0 %v530
        %v614 = vpop.f32.mrf.mxu0
        %v615 = vadd.f32 0.0, %v614
        %v616 = vpop.f32.mrf.mxu0
        %v617 = vpop.f32.mrf.mxu0
        %v618 = vadd.f32 0.0, %v617
        %v619 = vpop.f32.mrf.mxu0
        %620 = vmatprep.mubr.bf16.mxu0 0
        %621 = vmatmul.mubr.bf16.gmra.mxu0 %v533
        %v622 = vpop.f32.mrf.mxu0
        %v623 = vadd.f32 0.0, %v622
        %v624 = vpop.f32.mrf.mxu0
        %v625 = vpop.f32.mrf.mxu0
        %v626 = vadd.f32 0.0, %v625
        %v627 = vpop.f32.mrf.mxu0
        %628 = vmatprep.mubr.bf16.mxu0 0
        %629 = vmatmul.mubr.bf16.gmra.mxu0 %v536
        %v630 = vpop.f32.mrf.mxu0
        %v631 = vadd.f32 0.0, %v630
        %v632 = vpop.f32.mrf.mxu0
        %v633 = vpop.f32.mrf.mxu0
        %v634 = vadd.f32 0.0, %v633
        %v635 = vpop.f32.mrf.mxu0
        %636 = vmatprep.mubr.bf16.mxu0 0
        %637 = vmatmul.mubr.bf16.gmra.mxu0 %v539
        %v638 = vpop.f32.mrf.mxu0
        %v639 = vadd.f32 0.0, %v638
        %v640 = vpop.f32.mrf.mxu0
        %v641 = vpop.f32.mrf.mxu0
        %v642 = vadd.f32 0.0, %v641
        %v643 = vpop.f32.mrf.mxu0
        %644 = vdwg.mxu0
        %v645 = vmul.f32 %v469, %v583
        %v646 = vmul.f32 %v470, %v586
        %v647 = vmul.f32 %v471, %v591
        %v648 = vmul.f32 %v472, %v594
        %v649 = vmul.f32 %v473, %v599
        %v650 = vmul.f32 %v474, %v602
        %v651 = vmul.f32 %v475, %v607
        %v652 = vmul.f32 %v476, %v610
        %v653 = vmul.f32 %v477, %v615
        %v654 = vmul.f32 %v478, %v618
        %v655 = vmul.f32 %v479, %v623
        %v656 = vmul.f32 %v480, %v626
        %v657 = vmul.f32 %v481, %v631
        %v658 = vmul.f32 %v482, %v634
        %v659 = vmul.f32 %v483, %v639
        %v660 = vmul.f32 %v484, %v642
        %vm661 = vcmask 261120
        %662 = vst.msk [vmem:[%s257] sm:$0xff] %vm661, %v645
        %663 = vst.msk [vmem:[%s257 + $0x8] sm:$0xff] %vm661, %v646
        %664 = vst.msk [vmem:[%s257 + $0x10] sm:$0xff] %vm661, %v647
        %665 = vst.msk [vmem:[%s257 + $0x18] sm:$0xff] %vm661, %v648
        %666 = vst.msk [vmem:[%s257 + $0x20] sm:$0xff] %vm661, %v649
        %667 = vst.msk [vmem:[%s257 + $0x28] sm:$0xff] %vm661, %v650
        %668 = vst.msk [vmem:[%s257 + $0x30] sm:$0xff] %vm661, %v651
        %669 = vst.msk [vmem:[%s257 + $0x38] sm:$0xff] %vm661, %v652
        %670 = vst.msk [vmem:[%s257 + $0x40] sm:$0xff] %vm661, %v653
        %671 = vst.msk [vmem:[%s257 + $0x48] sm:$0xff] %vm661, %v654
        %672 = vst.msk [vmem:[%s257 + $0x50] sm:$0xff] %vm661, %v655
        %673 = vst.msk [vmem:[%s257 + $0x58] sm:$0xff] %vm661, %v656
        %674 = vst.msk [vmem:[%s257 + $0x60] sm:$0xff] %vm661, %v657
        %675 = vst.msk [vmem:[%s257 + $0x68] sm:$0xff] %vm661, %v658
        %676 = vst.msk [vmem:[%s257 + $0x70] sm:$0xff] %vm661, %v659
        %677 = vst.msk [vmem:[%s257 + $0x78] sm:$0xff] %vm661, %v660
        %s678 = scalar_lea.vmem %s3, 8
        %v679 = vld [vmem:[%s678] sm:$0xf]
        %v680 = vld [vmem:[%s678 + $0x4] sm:$0x1]
        %v683 = vunpack.c.l.b16 %v679
        %v684 = vunpack.c.l.b16 %v680
        %v685 = vpack.c.b16 %v684, %v683
        %v687 = vand.u32 %v685, %v544
        %689 = vmatprep.subr.bf16.mxu0 0
        %690 = vmatpush1.bf16.msra.mxu0 0
        %691 = vmatprep.subr.bf16.mxu0 0
        %692 = vmatpush1.bf16.msra.mxu0 0
        %693 = vmatprep.subr.bf16.mxu0 0
        %694 = vmatpush1.bf16.msra.mxu0 0
        %695 = vmatprep.subr.bf16.mxu0 0
        %696 = vmatpush1.bf16.msra.mxu0 0
        %697 = vmatprep.subr.bf16.mxu0 0
        %698 = vmatpush1.bf16.msra.mxu0 0
        %699 = vmatprep.subr.bf16.mxu0 0
        %700 = vmatpush1.bf16.msra.mxu0 0
        %701 = vmatprep.subr.bf16.mxu0 0
        %702 = vmatpush1.bf16.msra.mxu0 0
        %703 = vmatprep.subr.bf16.mxu0 0
        %704 = vmatpush1.bf16.msra.mxu0 %v687
        %705 = vmatprep.subr.bf16.mxu0 0
        %706 = vmatpush2.bf16.msra.mxu0 0
        %707 = vmatprep.subr.bf16.mxu0 0
        %708 = vmatpush2.bf16.msra.mxu0 0
        %709 = vmatprep.subr.bf16.mxu0 0
        %710 = vmatpush2.bf16.msra.mxu0 0
        %711 = vmatprep.subr.bf16.mxu0 0
        %712 = vmatpush2.bf16.msra.mxu0 0
        %713 = vmatprep.subr.bf16.mxu0 0
        %714 = vmatpush2.bf16.msra.mxu0 0
        %715 = vmatprep.subr.bf16.mxu0 0
        %716 = vmatpush2.bf16.msra.mxu0 0
        %717 = vmatprep.subr.bf16.mxu0 0
        %718 = vmatpush2.bf16.msra.mxu0 0
        %719 = vmatprep.subr.bf16.mxu0 0
        %720 = vmatpush2.bf16.msra.mxu0 0
        %721 = vmatprep.mubr.bf16.mxu0 0
        %722 = vmatmul.mubr.bf16.gmra.mxu0 %v518
        %v723 = vpop.f32.mrf.mxu0
        %v724 = vadd.f32 0.0, %v723
        %v725 = vpop.f32.mrf.mxu0
        %v726 = vpop.f32.mrf.mxu0
        %v727 = vadd.f32 0.0, %v726
        %v728 = vpop.f32.mrf.mxu0
        %729 = vmatprep.mubr.bf16.mxu0 0
        %730 = vmatmul.mubr.bf16.gmra.mxu0 %v521
        %v731 = vpop.f32.mrf.mxu0
        %v732 = vadd.f32 0.0, %v731
        %v733 = vpop.f32.mrf.mxu0
        %v734 = vpop.f32.mrf.mxu0
        %v735 = vadd.f32 0.0, %v734
        %v736 = vpop.f32.mrf.mxu0
        %737 = vmatprep.mubr.bf16.mxu0 0
        %738 = vmatmul.mubr.bf16.gmra.mxu0 %v524
        %v739 = vpop.f32.mrf.mxu0
        %v740 = vadd.f32 0.0, %v739
        %v741 = vpop.f32.mrf.mxu0
        %v742 = vpop.f32.mrf.mxu0
        %v743 = vadd.f32 0.0, %v742
        %v744 = vpop.f32.mrf.mxu0
        %745 = vmatprep.mubr.bf16.mxu0 0
        %746 = vmatmul.mubr.bf16.gmra.mxu0 %v527
        %v747 = vpop.f32.mrf.mxu0
        %v748 = vadd.f32 0.0, %v747
        %v749 = vpop.f32.mrf.mxu0
        %v750 = vpop.f32.mrf.mxu0
        %v751 = vadd.f32 0.0, %v750
        %v752 = vpop.f32.mrf.mxu0
        %753 = vmatprep.mubr.bf16.mxu0 0
        %754 = vmatmul.mubr.bf16.gmra.mxu0 %v530
        %v755 = vpop.f32.mrf.mxu0
        %v756 = vadd.f32 0.0, %v755
        %v757 = vpop.f32.mrf.mxu0
        %v758 = vpop.f32.mrf.mxu0
        %v759 = vadd.f32 0.0, %v758
        %v760 = vpop.f32.mrf.mxu0
        %761 = vmatprep.mubr.bf16.mxu0 0
        %762 = vmatmul.mubr.bf16.gmra.mxu0 %v533
        %v763 = vpop.f32.mrf.mxu0
        %v764 = vadd.f32 0.0, %v763
        %v765 = vpop.f32.mrf.mxu0
        %v766 = vpop.f32.mrf.mxu0
        %v767 = vadd.f32 0.0, %v766
        %v768 = vpop.f32.mrf.mxu0
        %769 = vmatprep.mubr.bf16.mxu0 0
        %770 = vmatmul.mubr.bf16.gmra.mxu0 %v536
        %v771 = vpop.f32.mrf.mxu0
        %v772 = vadd.f32 0.0, %v771
        %v773 = vpop.f32.mrf.mxu0
        %v774 = vpop.f32.mrf.mxu0
        %v775 = vadd.f32 0.0, %v774
        %v776 = vpop.f32.mrf.mxu0
        %777 = vmatprep.mubr.bf16.mxu0 0
        %778 = vmatmul.mubr.bf16.gmra.mxu0 %v539
        %v779 = vpop.f32.mrf.mxu0
        %v780 = vadd.f32 0.0, %v779
        %v781 = vpop.f32.mrf.mxu0
        %v782 = vpop.f32.mrf.mxu0
        %v783 = vadd.f32 0.0, %v782
        %v784 = vpop.f32.mrf.mxu0
        %785 = vdwg.mxu0
        %v786 = vmul.f32 %v469, %v724
        %v787 = vmul.f32 %v470, %v727
        %v788 = vmul.f32 %v471, %v732
        %v789 = vmul.f32 %v472, %v735
        %v790 = vmul.f32 %v473, %v740
        %v791 = vmul.f32 %v474, %v743
        %v792 = vmul.f32 %v475, %v748
        %v793 = vmul.f32 %v476, %v751
        %v794 = vmul.f32 %v477, %v756
        %v795 = vmul.f32 %v478, %v759
        %v796 = vmul.f32 %v479, %v764
        %v797 = vmul.f32 %v480, %v767
        %v798 = vmul.f32 %v481, %v772
        %v799 = vmul.f32 %v482, %v775
        %v800 = vmul.f32 %v483, %v780
        %v801 = vmul.f32 %v484, %v783
        %s802 = scalar_lea.vmem %s257, 128 [#allocation2]
        %803 = vst.msk [vmem:[%s802] sm:$0xff] %vm661, %v786
        %804 = vst.msk [vmem:[%s802 + $0x8] sm:$0xff] %vm661, %v787
        %805 = vst.msk [vmem:[%s802 + $0x10] sm:$0xff] %vm661, %v788
        %806 = vst.msk [vmem:[%s802 + $0x18] sm:$0xff] %vm661, %v789
        %807 = vst.msk [vmem:[%s802 + $0x20] sm:$0xff] %vm661, %v790
        %808 = vst.msk [vmem:[%s802 + $0x28] sm:$0xff] %vm661, %v791
        %809 = vst.msk [vmem:[%s802 + $0x30] sm:$0xff] %vm661, %v792
        %810 = vst.msk [vmem:[%s802 + $0x38] sm:$0xff] %vm661, %v793
        %811 = vst.msk [vmem:[%s802 + $0x40] sm:$0xff] %vm661, %v794
        %812 = vst.msk [vmem:[%s802 + $0x48] sm:$0xff] %vm661, %v795
        %813 = vst.msk [vmem:[%s802 + $0x50] sm:$0xff] %vm661, %v796
        %814 = vst.msk [vmem:[%s802 + $0x58] sm:$0xff] %vm661, %v797
        %815 = vst.msk [vmem:[%s802 + $0x60] sm:$0xff] %vm661, %v798
        %816 = vst.msk [vmem:[%s802 + $0x68] sm:$0xff] %vm661, %v799
        %817 = vst.msk [vmem:[%s802 + $0x70] sm:$0xff] %vm661, %v800
        %818 = vst.msk [vmem:[%s802 + $0x78] sm:$0xff] %vm661, %v801
        %s819 = sand.u32 %s161, 1
        %s820 = sand.u32 %s161, 1
        %s821 = smul.addr %s820, 256
        %s822 = scalar_lea.vmem [#allocation2], %s821
        // Predicated region
        $region45: #{first_block_forward.2} parent=43 // pred_check
          %p823 = pneg %p171
        $region46: #{first_block_forward.2} parent=43 // pred_check_branch
          %825 = sbr.rel (%p823) target = $region48
        $region47: #{first_block_forward.2} parent=43 // pred_region
          %s826 = smul.u32 16, %s17
          %s827 = smul.addr %s826, 8
          %s828 = scalar_lea.vmem %s6, %s827
          // Predicated region
          $region49: #{first_block_forward.2} parent=47 // pred_check
            _
          $region50: #{first_block_forward.2} parent=47 // pred_check_branch
            %830 = sbr.rel (0) target = $region52
          $region51: #{first_block_forward.2} parent=47 // pred_region
            // Predicated region
            $region53: #{first_block_forward.2} parent=51 // pred_check
              _
            $region54: #{first_block_forward.2} parent=51 // pred_check_branch
              %832 = sbr.rel (0) target = $region56
            $region55: #{first_block_forward.2} parent=51 // pred_region
              // Predicated region
              $region68: #{first_block_forward.2} parent=55 // pred_check
                _
              $region69: #{first_block_forward.2} parent=55 // pred_check_branch
                %910 = sbr.rel (0) target = $region71
              $region70: #{first_block_forward.2} parent=55 // pred_region
                loop: start=0, step=1, limit=1
                $region72: #{first_block_forward.2} parent=70 // loop_pre_header
                  _
                $region73: #{first_block_forward.2} parent=70 // loop_header
                  %s912 = sphi 0, %s916
                  %p913 = scmp.ge.s32.totalorder %s912, 1
                  %s917 = sphi %s822, %s822
                  %s918 = sphi %s828, %s828
                $region74: #{first_block_forward.2} parent=70 // loop_header_branch
                  %915 = sbr.rel (%p913) target = $region78
                $region75: #{first_block_forward.2} parent=70 // loop_body
                  %v919 = vld [vmem:[%s917] sm:$0xff]
                  %920 = vst [vmem:[%s918] sm:$0xff] %v919
                  %v921 = vld [vmem:[%s917 + $0x8] sm:$0xff]
                  %922 = vst [vmem:[%s918 + $0x8] sm:$0xff] %v921
                  %v923 = vld [vmem:[%s917 + $0x10] sm:$0xff]
                  %924 = vst [vmem:[%s918 + $0x10] sm:$0xff] %v923
                  %v925 = vld [vmem:[%s917 + $0x18] sm:$0xff]
                  %926 = vst [vmem:[%s918 + $0x18] sm:$0xff] %v925
                  %v927 = vld [vmem:[%s917 + $0x20] sm:$0xff]
                  %928 = vst [vmem:[%s918 + $0x20] sm:$0xff] %v927
                  %v929 = vld [vmem:[%s917 + $0x28] sm:$0xff]
                  %930 = vst [vmem:[%s918 + $0x28] sm:$0xff] %v929
                  %v931 = vld [vmem:[%s917 + $0x30] sm:$0xff]
                  %932 = vst [vmem:[%s918 + $0x30] sm:$0xff] %v931
                  %v933 = vld [vmem:[%s917 + $0x38] sm:$0xff]
                  %934 = vst [vmem:[%s918 + $0x38] sm:$0xff] %v933
                  %v935 = vld [vmem:[%s917 + $0x40] sm:$0xff]
                  %936 = vst [vmem:[%s918 + $0x40] sm:$0xff] %v935
                  %v937 = vld [vmem:[%s917 + $0x48] sm:$0xff]
                  %938 = vst [vmem:[%s918 + $0x48] sm:$0xff] %v937
                  %v939 = vld [vmem:[%s917 + $0x50] sm:$0xff]
                  %940 = vst [vmem:[%s918 + $0x50] sm:$0xff] %v939
                  %v941 = vld [vmem:[%s917 + $0x58] sm:$0xff]
                  %942 = vst [vmem:[%s918 + $0x58] sm:$0xff] %v941
                  %v943 = vld [vmem:[%s917 + $0x60] sm:$0xff]
                  %944 = vst [vmem:[%s918 + $0x60] sm:$0xff] %v943
                  %v945 = vld [vmem:[%s917 + $0x68] sm:$0xff]
                  %946 = vst [vmem:[%s918 + $0x68] sm:$0xff] %v945
                  %v947 = vld [vmem:[%s917 + $0x70] sm:$0xff]
                  %948 = vst [vmem:[%s918 + $0x70] sm:$0xff] %v947
                  %v949 = vld [vmem:[%s917 + $0x78] sm:$0xff]
                  %950 = vst [vmem:[%s918 + $0x78] sm:$0xff] %v949
                  %v951 = vld [vmem:[%s917 + $0x80] sm:$0xff]
                  %952 = vst [vmem:[%s918 + $0x200] sm:$0xff] %v951
                  %v953 = vld [vmem:[%s917 + $0x88] sm:$0xff]
                  %954 = vst [vmem:[%s918 + $0x208] sm:$0xff] %v953
                  %v955 = vld [vmem:[%s917 + $0x90] sm:$0xff]
                  %956 = vst [vmem:[%s918 + $0x210] sm:$0xff] %v955
                  %v957 = vld [vmem:[%s917 + $0x98] sm:$0xff]
                  %958 = vst [vmem:[%s918 + $0x218] sm:$0xff] %v957
                  %v959 = vld [vmem:[%s917 + $0xa0] sm:$0xff]
                  %960 = vst [vmem:[%s918 + $0x220] sm:$0xff] %v959
                  %v961 = vld [vmem:[%s917 + $0xa8] sm:$0xff]
                  %962 = vst [vmem:[%s918 + $0x228] sm:$0xff] %v961
                  %v963 = vld [vmem:[%s917 + $0xb0] sm:$0xff]
                  %964 = vst [vmem:[%s918 + $0x230] sm:$0xff] %v963
                  %v965 = vld [vmem:[%s917 + $0xb8] sm:$0xff]
                  %966 = vst [vmem:[%s918 + $0x238] sm:$0xff] %v965
                  %v967 = vld [vmem:[%s917 + $0xc0] sm:$0xff]
                  %968 = vst [vmem:[%s918 + $0x240] sm:$0xff] %v967
                  %v969 = vld [vmem:[%s917 + $0xc8] sm:$0xff]
                  %970 = vst [vmem:[%s918 + $0x248] sm:$0xff] %v969
                  %v971 = vld [vmem:[%s917 + $0xd0] sm:$0xff]
                  %972 = vst [vmem:[%s918 + $0x250] sm:$0xff] %v971
                  %v973 = vld [vmem:[%s917 + $0xd8] sm:$0xff]
                  %974 = vst [vmem:[%s918 + $0x258] sm:$0xff] %v973
                  %v975 = vld [vmem:[%s917 + $0xe0] sm:$0xff]
                  %976 = vst [vmem:[%s918 + $0x260] sm:$0xff] %v975
                  %v977 = vld [vmem:[%s917 + $0xe8] sm:$0xff]
                  %978 = vst [vmem:[%s918 + $0x268] sm:$0xff] %v977
                  %v979 = vld [vmem:[%s917 + $0xf0] sm:$0xff]
                  %980 = vst [vmem:[%s918 + $0x270] sm:$0xff] %v979
                  %v981 = vld [vmem:[%s917 + $0xf8] sm:$0xff]
                  %982 = vst [vmem:[%s918 + $0x278] sm:$0xff] %v981
                $region76: #{first_block_forward.2} parent=70 // loop_footer
                  %s916 = sadd.s32 1, %s912
                $region77: #{first_block_forward.2} parent=70 // loop_footer_branch
                  %911 = sbr.rel target = $region73
                $region78: #{first_block_forward.2} parent=70 // loop_exit
                  _
              $region71: #{first_block_forward.2} parent=55 // pred_fallthru
                _
              // Predicated region
              $region79: #{first_block_forward.2} parent=55 // pred_check
                _
              $region80: #{first_block_forward.2} parent=55 // pred_check_branch
                %984 = sbr.rel target = $region82
              $region81: #{first_block_forward.2} parent=55 // pred_region
                _
              $region82: #{first_block_forward.2} parent=55 // pred_fallthru
                _
            $region56: #{first_block_forward.2} parent=51 // pred_fallthru
              _
            // Predicated region
            $region57: #{first_block_forward.2} parent=51 // pred_check
              _
            $region58: #{first_block_forward.2} parent=51 // pred_check_branch
              %834 = sbr.rel target = $region60
            $region59: #{first_block_forward.2} parent=51 // pred_region
              %s836 = ssub.s32 256, 1
              loop: start=0, step=1, limit=1
              $region61: #{first_block_forward.2} parent=59 // loop_pre_header
                _
              $region62: #{first_block_forward.2} parent=59 // loop_header
                %s838 = sphi 0, %s842
                %p839 = scmp.ge.s32.totalorder %s838, 1
                %s843 = sphi %s822, %s822
                %s844 = sphi %s828, %s828
              $region63: #{first_block_forward.2} parent=59 // loop_header_branch
                %841 = sbr.rel (%p839) target = $region67
              $region64: #{first_block_forward.2} parent=59 // loop_body
                %v845 = vld [vmem:[%s843] sm:%s836]
                %846 = vst [vmem:[%s844] sm:%s836] %v845
                %v847 = vld [vmem:[%s843 + $0x8] sm:%s836]
                %848 = vst [vmem:[%s844 + $0x8] sm:%s836] %v847
                %v849 = vld [vmem:[%s843 + $0x10] sm:%s836]
                %850 = vst [vmem:[%s844 + $0x10] sm:%s836] %v849
                %v851 = vld [vmem:[%s843 + $0x18] sm:%s836]
                %852 = vst [vmem:[%s844 + $0x18] sm:%s836] %v851
                %v853 = vld [vmem:[%s843 + $0x20] sm:%s836]
                %854 = vst [vmem:[%s844 + $0x20] sm:%s836] %v853
                %v855 = vld [vmem:[%s843 + $0x28] sm:%s836]
                %856 = vst [vmem:[%s844 + $0x28] sm:%s836] %v855
                %v857 = vld [vmem:[%s843 + $0x30] sm:%s836]
                %858 = vst [vmem:[%s844 + $0x30] sm:%s836] %v857
                %v859 = vld [vmem:[%s843 + $0x38] sm:%s836]
                %860 = vst [vmem:[%s844 + $0x38] sm:%s836] %v859
                %v861 = vld [vmem:[%s843 + $0x40] sm:%s836]
                %862 = vst [vmem:[%s844 + $0x40] sm:%s836] %v861
                %v863 = vld [vmem:[%s843 + $0x48] sm:%s836]
                %864 = vst [vmem:[%s844 + $0x48] sm:%s836] %v863
                %v865 = vld [vmem:[%s843 + $0x50] sm:%s836]
                %866 = vst [vmem:[%s844 + $0x50] sm:%s836] %v865
                %v867 = vld [vmem:[%s843 + $0x58] sm:%s836]
                %868 = vst [vmem:[%s844 + $0x58] sm:%s836] %v867
                %v869 = vld [vmem:[%s843 + $0x60] sm:%s836]
                %870 = vst [vmem:[%s844 + $0x60] sm:%s836] %v869
                %v871 = vld [vmem:[%s843 + $0x68] sm:%s836]
                %872 = vst [vmem:[%s844 + $0x68] sm:%s836] %v871
                %v873 = vld [vmem:[%s843 + $0x70] sm:%s836]
                %874 = vst [vmem:[%s844 + $0x70] sm:%s836] %v873
                %v875 = vld [vmem:[%s843 + $0x78] sm:%s836]
                %876 = vst [vmem:[%s844 + $0x78] sm:%s836] %v875
                %v877 = vld [vmem:[%s843 + $0x80] sm:%s836]
                %878 = vst [vmem:[%s844 + $0x200] sm:%s836] %v877
                %v879 = vld [vmem:[%s843 + $0x88] sm:%s836]
                %880 = vst [vmem:[%s844 + $0x208] sm:%s836] %v879
                %v881 = vld [vmem:[%s843 + $0x90] sm:%s836]
                %882 = vst [vmem:[%s844 + $0x210] sm:%s836] %v881
                %v883 = vld [vmem:[%s843 + $0x98] sm:%s836]
                %884 = vst [vmem:[%s844 + $0x218] sm:%s836] %v883
                %v885 = vld [vmem:[%s843 + $0xa0] sm:%s836]
                %886 = vst [vmem:[%s844 + $0x220] sm:%s836] %v885
                %v887 = vld [vmem:[%s843 + $0xa8] sm:%s836]
                %888 = vst [vmem:[%s844 + $0x228] sm:%s836] %v887
                %v889 = vld [vmem:[%s843 + $0xb0] sm:%s836]
                %890 = vst [vmem:[%s844 + $0x230] sm:%s836] %v889
                %v891 = vld [vmem:[%s843 + $0xb8] sm:%s836]
                %892 = vst [vmem:[%s844 + $0x238] sm:%s836] %v891
                %v893 = vld [vmem:[%s843 + $0xc0] sm:%s836]
                %894 = vst [vmem:[%s844 + $0x240] sm:%s836] %v893
                %v895 = vld [vmem:[%s843 + $0xc8] sm:%s836]
                %896 = vst [vmem:[%s844 + $0x248] sm:%s836] %v895
                %v897 = vld [vmem:[%s843 + $0xd0] sm:%s836]
                %898 = vst [vmem:[%s844 + $0x250] sm:%s836] %v897
                %v899 = vld [vmem:[%s843 + $0xd8] sm:%s836]
                %900 = vst [vmem:[%s844 + $0x258] sm:%s836] %v899
                %v901 = vld [vmem:[%s843 + $0xe0] sm:%s836]
                %902 = vst [vmem:[%s844 + $0x260] sm:%s836] %v901
                %v903 = vld [vmem:[%s843 + $0xe8] sm:%s836]
                %904 = vst [vmem:[%s844 + $0x268] sm:%s836] %v903
                %v905 = vld [vmem:[%s843 + $0xf0] sm:%s836]
                %906 = vst [vmem:[%s844 + $0x270] sm:%s836] %v905
                %v907 = vld [vmem:[%s843 + $0xf8] sm:%s836]
                %908 = vst [vmem:[%s844 + $0x278] sm:%s836] %v907
              $region65: #{first_block_forward.2} parent=59 // loop_footer
                %s842 = sadd.s32 1, %s838
              $region66: #{first_block_forward.2} parent=59 // loop_footer_branch
                %837 = sbr.rel target = $region62
              $region67: #{first_block_forward.2} parent=59 // loop_exit
                _
            $region60: #{first_block_forward.2} parent=51 // pred_fallthru
              _
          $region52: #{first_block_forward.2} parent=47 // pred_fallthru
            _
          %985 = vnop
        $region48: #{first_block_forward.2} parent=43 // pred_fallthru
          _
      $region44: #{first_block_forward.2} parent=5 // pred_fallthru
        _
      %p986 = scmp.le.s32.totalorder 2, %s12
      // Predicated region
      $region83: #{first_block_forward.2} parent=5 // pred_check
        %p987 = pneg %p986
      $region84: #{first_block_forward.2} parent=5 // pred_check_branch
        %989 = sbr.rel (%p987) target = $region86
      $region85: #{first_block_forward.2} parent=5 // pred_region
        %s990 = ssub.s32 %s12, 2
        // Predicated region
        $region87: #{first_block_forward.2} parent=85 // pred_check
          %p991 = pneg %p177
        $region88: #{first_block_forward.2} parent=85 // pred_check_branch
          %993 = sbr.rel (%p991) target = $region90
        $region89: #{first_block_forward.2} parent=85 // pred_region
          %s994 = sand.u32 %s162, 1
          %s995 = sand.u32 %s162, 1
          %s996 = smul.addr %s995, 256
          %s997 = scalar_lea.vmem [#allocation2], %s996
        $region90: #{first_block_forward.2} parent=85 // pred_fallthru
          _
      $region86: #{first_block_forward.2} parent=5 // pred_fallthru
        _
    $region6: #{first_block_forward.2} parent=1 // loop_footer
      %s16 = sadd.s32 1, %s12
    $region7: #{first_block_forward.2} parent=1 // loop_footer_branch
      %11 = sbr.rel target = $region3
    $region8: #{first_block_forward.2} parent=1 // loop_exit
      _

// kernel: first_block_forward.3
$region0: #{first_block_forward.3}
  #allocation0 [shape = 'u32[]', space=smem, size = 0x4, offset = 0x4, fixed_abs, tag = 'smem constant byte address 0x4 - core index']
  #allocation1 [shape = 'u32[144,128]{1,0:T(1,128)}', space=vmem, size = 0x12000, scoped, tag = 'internal scratch']
  %s0 = inlined_call_operand.vmem [shape: f32[2,256,32], index: 0, kind: input, shape index: {}]
  %s1 = inlined_call_operand.vmem [shape: bf16[2,32,32], index: 1, kind: input, shape index: {}]
  %s2 = inlined_call_operand.vmem [shape: f32[1,32], index: 2, kind: input, shape index: {}]
  %s3 = inlined_call_operand.vmem [shape: f32[1,32], index: 3, kind: input, shape index: {}]
  %s4 = inlined_call_operand.vmem [shape: f32[256,32], index: 4, kind: output, shape index: {}]
  %s5 = sld [smem:[#allocation0]]
  $region87: #{first_block_forward.3} parent=0
    _
  %s7 = ssub.s32 1, %s5
  %s8 = scalar_select 0, %s7, %s5
  $region1: #{first_block_forward.3} parent=0
    #allocation2 [shape = 'u8[262144]{0}', space=vmem, size = 0x40000, scoped, tag = 'input window, operand 0']
    loop: start=0, step=1, limit=4
    $region2: #{first_block_forward.3} parent=1 // loop_pre_header
      _
    $region3: #{first_block_forward.3} parent=1 // loop_header
      %s10 = sphi 0, %s14
      %p11 = scmp.ge.s32.totalorder %s10, 4
      %s20 = sphi 0, %s22
      %s23 = sphi 0, %s20
      %s24 = sphi 0, %s23
      %s40 = sphi 0, %s24
      %s44 = sphi 0, %s44
      %s46 = sphi 0, %s44
      %s47 = sphi 0, %s46
      %s61 = sphi 0, %s47
      %s65 = sphi 0, %s65
      %s67 = sphi 0, %s65
      %s68 = sphi 0, %s67
      %s82 = sphi 0, %s68
      %s86 = sphi 0, %s86
      %s88 = sphi 0, %s86
      %s89 = sphi 0, %s88
      %s103 = sphi 0, %s89
      %s109 = sphi 0, %s111
      %s112 = sphi 0, %s109
      %s113 = sphi 0, %s112
      %s129 = sphi 0, %s113
    $region4: #{first_block_forward.3} parent=1 // loop_header_branch
      %13 = sbr.rel (%p11) target = $region8
    $region5: #{first_block_forward.3} parent=1 // loop_body
      %s15 = ssub.s32 %s10, 1
      %s16 = ssub.s32 %s10, 2
      %s17 = sadd.s32 %s10, 1
      %s18 = ssub.s32 %s10, %s17
      %p19 = scmp.eq.s32.totalorder %s18, 0
      %s21 = sadd.s32 %s20, 1
      %s22 = scalar_select %p19, %s20, %s21
      %p25 = pneg %p19
      %p26 = scmp.eq.s32.totalorder %s10, 1
      %p27 = por %p25, %p26
      %p28 = scmp.ne.s32.totalorder %s20, %s23
      %p29 = scmp.eq.s32.totalorder %s10, 0
      %p30 = por %p28, %p29
      %p31 = scmp.ne.s32.totalorder %s20, %s23
      %p32 = scmp.eq.s32.totalorder %s15, 1
      %p33 = por %p31, %p32
      %p34 = scmp.ne.s32.totalorder %s23, %s24
      %p35 = scmp.eq.s32.totalorder %s15, 0
      %p36 = por %p34, %p35
      %p37 = scmp.ne.s32.totalorder %s23, %s24
      %p38 = scmp.eq.s32.totalorder %s16, 1
      %p39 = por %p37, %p38
      %p41 = scmp.ne.s32.totalorder %s24, %s40
      %p42 = scmp.eq.s32.totalorder %s16, 0
      %p43 = por %p41, %p42
      %s45 = sadd.s32 %s44, 1
      %p48 = scmp.eq.s32.totalorder %s10, 1
      %p49 = scmp.ne.s32.totalorder %s44, %s46
      %p50 = scmp.eq.s32.totalorder %s10, 0
      %p51 = por %p49, %p50
      %p52 = scmp.ne.s32.totalorder %s44, %s46
      %p53 = scmp.eq.s32.totalorder %s15, 1
      %p54 = por %p52, %p53
      %p55 = scmp.ne.s32.totalorder %s46, %s47
      %p56 = scmp.eq.s32.totalorder %s15, 0
      %p57 = por %p55, %p56
      %p58 = scmp.ne.s32.totalorder %s46, %s47
      %p59 = scmp.eq.s32.totalorder %s16, 1
      %p60 = por %p58, %p59
      %p62 = scmp.ne.s32.totalorder %s47, %s61
      %p63 = scmp.eq.s32.totalorder %s16, 0
      %p64 = por %p62, %p63
      %s66 = sadd.s32 %s65, 1
      %p69 = scmp.eq.s32.totalorder %s10, 1
      %p70 = scmp.ne.s32.totalorder %s65, %s67
      %p71 = scmp.eq.s32.totalorder %s10, 0
      %p72 = por %p70, %p71
      %p73 = scmp.ne.s32.totalorder %s65, %s67
      %p74 = scmp.eq.s32.totalorder %s15, 1
      %p75 = por %p73, %p74
      %p76 = scmp.ne.s32.totalorder %s67, %s68
      %p77 = scmp.eq.s32.totalorder %s15, 0
      %p78 = por %p76, %p77
      %p79 = scmp.ne.s32.totalorder %s67, %s68
      %p80 = scmp.eq.s32.totalorder %s16, 1
      %p81 = por %p79, %p80
      %p83 = scmp.ne.s32.totalorder %s68, %s82
      %p84 = scmp.eq.s32.totalorder %s16, 0
      %p85 = por %p83, %p84
      %s87 = sadd.s32 %s86, 1
      %p90 = scmp.eq.s32.totalorder %s10, 1
      %p91 = scmp.ne.s32.totalorder %s86, %s88
      %p92 = scmp.eq.s32.totalorder %s10, 0
      %p93 = por %p91, %p92
      %p94 = scmp.ne.s32.totalorder %s86, %s88
      %p95 = scmp.eq.s32.totalorder %s15, 1
      %p96 = por %p94, %p95
      %p97 = scmp.ne.s32.totalorder %s88, %s89
      %p98 = scmp.eq.s32.totalorder %s15, 0
      %p99 = por %p97, %p98
      %p100 = scmp.ne.s32.totalorder %s88, %s89
      %p101 = scmp.eq.s32.totalorder %s16, 1
      %p102 = por %p100, %p101
      %p104 = scmp.ne.s32.totalorder %s89, %s103
      %p105 = scmp.eq.s32.totalorder %s16, 0
      %p106 = por %p104, %p105
      %s107 = ssub.s32 %s10, %s17
      %p108 = scmp.eq.s32.totalorder %s107, 0
      %s110 = sadd.s32 %s109, 1
      %s111 = scalar_select %p108, %s109, %s110
      %p114 = pneg %p108
      %p115 = scmp.eq.s32.totalorder %s10, 1
      %p116 = por %p114, %p115
      %p117 = scmp.ne.s32.totalorder %s109, %s112
      %p118 = scmp.eq.s32.totalorder %s10, 0
      %p119 = por %p117, %p118
      %p120 = scmp.ne.s32.totalorder %s109, %s112
      %p121 = scmp.eq.s32.totalorder %s15, 1
      %p122 = por %p120, %p121
      %p123 = scmp.ne.s32.totalorder %s112, %s113
      %p124 = scmp.eq.s32.totalorder %s15, 0
      %p125 = por %p123, %p124
      %p126 = scmp.ne.s32.totalorder %s112, %s113
      %p127 = scmp.eq.s32.totalorder %s16, 1
      %p128 = por %p126, %p127
      %p130 = scmp.ne.s32.totalorder %s113, %s129
      %p131 = scmp.eq.s32.totalorder %s16, 0
      %p132 = por %p130, %p131
      %p133 = scmp.le.s32.totalorder 1, %s10
      %p134 = scmp.lt.s32.totalorder %s10, 3
      %p135 = pnand %p133, %p134
      %p136 = pneg %p135
      // Predicated region
      $region9: #{first_block_forward.3} parent=5 // pred_check
        _
      $region10: #{first_block_forward.3} parent=5 // pred_check_branch
        %138 = sbr.rel (%p135) target = $region12
      $region11: #{first_block_forward.3} parent=5 // pred_region
        %s139 = ssub.s32 %s10, 1
        // Predicated region
        $region13: #{first_block_forward.3} parent=11 // pred_check
          %p140 = pneg %p57
        $region14: #{first_block_forward.3} parent=11 // pred_check_branch
          %142 = sbr.rel (%p140) target = $region16
        $region15: #{first_block_forward.3} parent=11 // pred_region
          _
        $region16: #{first_block_forward.3} parent=11 // pred_fallthru
          _
        // Predicated region
        $region17: #{first_block_forward.3} parent=11 // pred_check
          %p143 = pneg %p78
        $region18: #{first_block_forward.3} parent=11 // pred_check_branch
          %145 = sbr.rel (%p143) target = $region20
        $region19: #{first_block_forward.3} parent=11 // pred_region
          _
        $region20: #{first_block_forward.3} parent=11 // pred_fallthru
          _
        // Predicated region
        $region21: #{first_block_forward.3} parent=11 // pred_check
          %p146 = pneg %p99
        $region22: #{first_block_forward.3} parent=11 // pred_check_branch
          %148 = sbr.rel (%p146) target = $region24
        $region23: #{first_block_forward.3} parent=11 // pred_region
          _
        $region24: #{first_block_forward.3} parent=11 // pred_fallthru
          _
      $region12: #{first_block_forward.3} parent=5 // pred_fallthru
        _
      %p149 = scmp.lt.s32.totalorder %s10, 2
      // Predicated region
      $region25: #{first_block_forward.3} parent=5 // pred_check
        %p150 = pneg %p149
      $region26: #{first_block_forward.3} parent=5 // pred_check_branch
        %152 = sbr.rel (%p150) target = $region28
      $region27: #{first_block_forward.3} parent=5 // pred_region
        // Predicated region
        $region29: #{first_block_forward.3} parent=27 // pred_check
          %p153 = pneg %p30
        $region30: #{first_block_forward.3} parent=27 // pred_check_branch
          %155 = sbr.rel (%p153) target = $region32
        $region31: #{first_block_forward.3} parent=27 // pred_region
          %s156 = sand.u32 %s20, 1
          %s157 = sand.u32 %s20, 1
          %s158 = smul.addr %s157, 256
          %s159 = scalar_lea.vmem [#allocation2], %s158
          %s160 = smul.u32 16, %s10
          %s161 = smul.addr %s160, 8
          %s162 = scalar_lea.vmem %s0, %s161
          // Predicated region
          $region33: #{first_block_forward.3} parent=31 // pred_check
            _
          $region34: #{first_block_forward.3} parent=31 // pred_check_branch
            %164 = sbr.rel (0) target = $region36
          $region35: #{first_block_forward.3} parent=31 // pred_region
            // Predicated region
            $region37: #{first_block_forward.3} parent=35 // pred_check
              _
            $region38: #{first_block_forward.3} parent=35 // pred_check_branch
              %166 = sbr.rel (0) target = $region40
            $region39: #{first_block_forward.3} parent=35 // pred_region
              // Predicated region
              $region52: #{first_block_forward.3} parent=39 // pred_check
                _
              $region53: #{first_block_forward.3} parent=39 // pred_check_branch
                %244 = sbr.rel (0) target = $region55
              $region54: #{first_block_forward.3} parent=39 // pred_region
                loop: start=0, step=1, limit=1
                $region56: #{first_block_forward.3} parent=54 // loop_pre_header
                  _
                $region57: #{first_block_forward.3} parent=54 // loop_header
                  %s246 = sphi 0, %s250
                  %p247 = scmp.ge.s32.totalorder %s246, 1
                  %s251 = sphi %s162, %s162
                  %s252 = sphi %s159, %s159
                $region58: #{first_block_forward.3} parent=54 // loop_header_branch
                  %249 = sbr.rel (%p247) target = $region62
                $region59: #{first_block_forward.3} parent=54 // loop_body
                  %v253 = vld [vmem:[%s251] sm:$0xff]
                  %254 = vst [vmem:[%s252] sm:$0xff] %v253
                  %v255 = vld [vmem:[%s251 + $0x8] sm:$0xff]
                  %256 = vst [vmem:[%s252 + $0x8] sm:$0xff] %v255
                  %v257 = vld [vmem:[%s251 + $0x10] sm:$0xff]
                  %258 = vst [vmem:[%s252 + $0x10] sm:$0xff] %v257
                  %v259 = vld [vmem:[%s251 + $0x18] sm:$0xff]
                  %260 = vst [vmem:[%s252 + $0x18] sm:$0xff] %v259
                  %v261 = vld [vmem:[%s251 + $0x20] sm:$0xff]
                  %262 = vst [vmem:[%s252 + $0x20] sm:$0xff] %v261
                  %v263 = vld [vmem:[%s251 + $0x28] sm:$0xff]
                  %264 = vst [vmem:[%s252 + $0x28] sm:$0xff] %v263
                  %v265 = vld [vmem:[%s251 + $0x30] sm:$0xff]
                  %266 = vst [vmem:[%s252 + $0x30] sm:$0xff] %v265
                  %v267 = vld [vmem:[%s251 + $0x38] sm:$0xff]
                  %268 = vst [vmem:[%s252 + $0x38] sm:$0xff] %v267
                  %v269 = vld [vmem:[%s251 + $0x40] sm:$0xff]
                  %270 = vst [vmem:[%s252 + $0x40] sm:$0xff] %v269
                  %v271 = vld [vmem:[%s251 + $0x48] sm:$0xff]
                  %272 = vst [vmem:[%s252 + $0x48] sm:$0xff] %v271
                  %v273 = vld [vmem:[%s251 + $0x50] sm:$0xff]
                  %274 = vst [vmem:[%s252 + $0x50] sm:$0xff] %v273
                  %v275 = vld [vmem:[%s251 + $0x58] sm:$0xff]
                  %276 = vst [vmem:[%s252 + $0x58] sm:$0xff] %v275
                  %v277 = vld [vmem:[%s251 + $0x60] sm:$0xff]
                  %278 = vst [vmem:[%s252 + $0x60] sm:$0xff] %v277
                  %v279 = vld [vmem:[%s251 + $0x68] sm:$0xff]
                  %280 = vst [vmem:[%s252 + $0x68] sm:$0xff] %v279
                  %v281 = vld [vmem:[%s251 + $0x70] sm:$0xff]
                  %282 = vst [vmem:[%s252 + $0x70] sm:$0xff] %v281
                  %v283 = vld [vmem:[%s251 + $0x78] sm:$0xff]
                  %284 = vst [vmem:[%s252 + $0x78] sm:$0xff] %v283
                  %v285 = vld [vmem:[%s251 + $0x100] sm:$0xff]
                  %286 = vst [vmem:[%s252 + $0x80] sm:$0xff] %v285
                  %v287 = vld [vmem:[%s251 + $0x108] sm:$0xff]
                  %288 = vst [vmem:[%s252 + $0x88] sm:$0xff] %v287
                  %v289 = vld [vmem:[%s251 + $0x110] sm:$0xff]
                  %290 = vst [vmem:[%s252 + $0x90] sm:$0xff] %v289
                  %v291 = vld [vmem:[%s251 + $0x118] sm:$0xff]
                  %292 = vst [vmem:[%s252 + $0x98] sm:$0xff] %v291
                  %v293 = vld [vmem:[%s251 + $0x120] sm:$0xff]
                  %294 = vst [vmem:[%s252 + $0xa0] sm:$0xff] %v293
                  %v295 = vld [vmem:[%s251 + $0x128] sm:$0xff]
                  %296 = vst [vmem:[%s252 + $0xa8] sm:$0xff] %v295
                  %v297 = vld [vmem:[%s251 + $0x130] sm:$0xff]
                  %298 = vst [vmem:[%s252 + $0xb0] sm:$0xff] %v297
                  %v299 = vld [vmem:[%s251 + $0x138] sm:$0xff]
                  %300 = vst [vmem:[%s252 + $0xb8] sm:$0xff] %v299
                  %v301 = vld [vmem:[%s251 + $0x140] sm:$0xff]
                  %302 = vst [vmem:[%s252 + $0xc0] sm:$0xff] %v301
                  %v303 = vld [vmem:[%s251 + $0x148] sm:$0xff]
                  %304 = vst [vmem:[%s252 + $0xc8] sm:$0xff] %v303
                  %v305 = vld [vmem:[%s251 + $0x150] sm:$0xff]
                  %306 = vst [vmem:[%s252 + $0xd0] sm:$0xff] %v305
                  %v307 = vld [vmem:[%s251 + $0x158] sm:$0xff]
                  %308 = vst [vmem:[%s252 + $0xd8] sm:$0xff] %v307
                  %v309 = vld [vmem:[%s251 + $0x160] sm:$0xff]
                  %310 = vst [vmem:[%s252 + $0xe0] sm:$0xff] %v309
                  %v311 = vld [vmem:[%s251 + $0x168] sm:$0xff]
                  %312 = vst [vmem:[%s252 + $0xe8] sm:$0xff] %v311
                  %v313 = vld [vmem:[%s251 + $0x170] sm:$0xff]
                  %314 = vst [vmem:[%s252 + $0xf0] sm:$0xff] %v313
                  %v315 = vld [vmem:[%s251 + $0x178] sm:$0xff]
                  %316 = vst [vmem:[%s252 + $0xf8] sm:$0xff] %v315
                $region60: #{first_block_forward.3} parent=54 // loop_footer
                  %s250 = sadd.s32 1, %s246
                $region61: #{first_block_forward.3} parent=54 // loop_footer_branch
                  %245 = sbr.rel target = $region57
                $region62: #{first_block_forward.3} parent=54 // loop_exit
                  _
              $region55: #{first_block_forward.3} parent=39 // pred_fallthru
                _
              // Predicated region
              $region63: #{first_block_forward.3} parent=39 // pred_check
                _
              $region64: #{first_block_forward.3} parent=39 // pred_check_branch
                %318 = sbr.rel target = $region66
              $region65: #{first_block_forward.3} parent=39 // pred_region
                _
              $region66: #{first_block_forward.3} parent=39 // pred_fallthru
                _
            $region40: #{first_block_forward.3} parent=35 // pred_fallthru
              _
            // Predicated region
            $region41: #{first_block_forward.3} parent=35 // pred_check
              _
            $region42: #{first_block_forward.3} parent=35 // pred_check_branch
              %168 = sbr.rel target = $region44
            $region43: #{first_block_forward.3} parent=35 // pred_region
              %s170 = ssub.s32 256, 1
              loop: start=0, step=1, limit=1
              $region45: #{first_block_forward.3} parent=43 // loop_pre_header
                _
              $region46: #{first_block_forward.3} parent=43 // loop_header
                %s172 = sphi 0, %s176
                %p173 = scmp.ge.s32.totalorder %s172, 1
                %s177 = sphi %s162, %s162
                %s178 = sphi %s159, %s159
              $region47: #{first_block_forward.3} parent=43 // loop_header_branch
                %175 = sbr.rel (%p173) target = $region51
              $region48: #{first_block_forward.3} parent=43 // loop_body
                %v179 = vld [vmem:[%s177] sm:%s170]
                %180 = vst [vmem:[%s178] sm:%s170] %v179
                %v181 = vld [vmem:[%s177 + $0x8] sm:%s170]
                %182 = vst [vmem:[%s178 + $0x8] sm:%s170] %v181
                %v183 = vld [vmem:[%s177 + $0x10] sm:%s170]
                %184 = vst [vmem:[%s178 + $0x10] sm:%s170] %v183
                %v185 = vld [vmem:[%s177 + $0x18] sm:%s170]
                %186 = vst [vmem:[%s178 + $0x18] sm:%s170] %v185
                %v187 = vld [vmem:[%s177 + $0x20] sm:%s170]
                %188 = vst [vmem:[%s178 + $0x20] sm:%s170] %v187
                %v189 = vld [vmem:[%s177 + $0x28] sm:%s170]
                %190 = vst [vmem:[%s178 + $0x28] sm:%s170] %v189
                %v191 = vld [vmem:[%s177 + $0x30] sm:%s170]
                %192 = vst [vmem:[%s178 + $0x30] sm:%s170] %v191
                %v193 = vld [vmem:[%s177 + $0x38] sm:%s170]
                %194 = vst [vmem:[%s178 + $0x38] sm:%s170] %v193
                %v195 = vld [vmem:[%s177 + $0x40] sm:%s170]
                %196 = vst [vmem:[%s178 + $0x40] sm:%s170] %v195
                %v197 = vld [vmem:[%s177 + $0x48] sm:%s170]
                %198 = vst [vmem:[%s178 + $0x48] sm:%s170] %v197
                %v199 = vld [vmem:[%s177 + $0x50] sm:%s170]
                %200 = vst [vmem:[%s178 + $0x50] sm:%s170] %v199
                %v201 = vld [vmem:[%s177 + $0x58] sm:%s170]
                %202 = vst [vmem:[%s178 + $0x58] sm:%s170] %v201
                %v203 = vld [vmem:[%s177 + $0x60] sm:%s170]
                %204 = vst [vmem:[%s178 + $0x60] sm:%s170] %v203
                %v205 = vld [vmem:[%s177 + $0x68] sm:%s170]
                %206 = vst [vmem:[%s178 + $0x68] sm:%s170] %v205
                %v207 = vld [vmem:[%s177 + $0x70] sm:%s170]
                %208 = vst [vmem:[%s178 + $0x70] sm:%s170] %v207
                %v209 = vld [vmem:[%s177 + $0x78] sm:%s170]
                %210 = vst [vmem:[%s178 + $0x78] sm:%s170] %v209
                %v211 = vld [vmem:[%s177 + $0x100] sm:%s170]
                %212 = vst [vmem:[%s178 + $0x80] sm:%s170] %v211
                %v213 = vld [vmem:[%s177 + $0x108] sm:%s170]
                %214 = vst [vmem:[%s178 + $0x88] sm:%s170] %v213
                %v215 = vld [vmem:[%s177 + $0x110] sm:%s170]
                %216 = vst [vmem:[%s178 + $0x90] sm:%s170] %v215
                %v217 = vld [vmem:[%s177 + $0x118] sm:%s170]
                %218 = vst [vmem:[%s178 + $0x98] sm:%s170] %v217
                %v219 = vld [vmem:[%s177 + $0x120] sm:%s170]
                %220 = vst [vmem:[%s178 + $0xa0] sm:%s170] %v219
                %v221 = vld [vmem:[%s177 + $0x128] sm:%s170]
                %222 = vst [vmem:[%s178 + $0xa8] sm:%s170] %v221
                %v223 = vld [vmem:[%s177 + $0x130] sm:%s170]
                %224 = vst [vmem:[%s178 + $0xb0] sm:%s170] %v223
                %v225 = vld [vmem:[%s177 + $0x138] sm:%s170]
                %226 = vst [vmem:[%s178 + $0xb8] sm:%s170] %v225
                %v227 = vld [vmem:[%s177 + $0x140] sm:%s170]
                %228 = vst [vmem:[%s178 + $0xc0] sm:%s170] %v227
                %v229 = vld [vmem:[%s177 + $0x148] sm:%s170]
                %230 = vst [vmem:[%s178 + $0xc8] sm:%s170] %v229
                %v231 = vld [vmem:[%s177 + $0x150] sm:%s170]
                %232 = vst [vmem:[%s178 + $0xd0] sm:%s170] %v231
                %v233 = vld [vmem:[%s177 + $0x158] sm:%s170]
                %234 = vst [vmem:[%s178 + $0xd8] sm:%s170] %v233
                %v235 = vld [vmem:[%s177 + $0x160] sm:%s170]
                %236 = vst [vmem:[%s178 + $0xe0] sm:%s170] %v235
                %v237 = vld [vmem:[%s177 + $0x168] sm:%s170]
                %238 = vst [vmem:[%s178 + $0xe8] sm:%s170] %v237
                %v239 = vld [vmem:[%s177 + $0x170] sm:%s170]
                %240 = vst [vmem:[%s178 + $0xf0] sm:%s170] %v239
                %v241 = vld [vmem:[%s177 + $0x178] sm:%s170]
                %242 = vst [vmem:[%s178 + $0xf8] sm:%s170] %v241
              $region49: #{first_block_forward.3} parent=43 // loop_footer
                %s176 = sadd.s32 1, %s172
              $region50: #{first_block_forward.3} parent=43 // loop_footer_branch
                %171 = sbr.rel target = $region46
              $region51: #{first_block_forward.3} parent=43 // loop_exit
                _
            $region44: #{first_block_forward.3} parent=35 // pred_fallthru
              _
          $region36: #{first_block_forward.3} parent=31 // pred_fallthru
            _
          %319 = vnop
        $region32: #{first_block_forward.3} parent=27 // pred_fallthru
          _
      $region28: #{first_block_forward.3} parent=5 // pred_fallthru
        _
      %p320 = scmp.le.s32.totalorder 1, %s10
      %p321 = scmp.lt.s32.totalorder %s10, 3
      %p322 = pnand %p320, %p321
      %p323 = pneg %p322
      // Predicated region
      $region67: #{first_block_forward.3} parent=5 // pred_check
        _
      $region68: #{first_block_forward.3} parent=5 // pred_check_branch
        %325 = sbr.rel (%p322) target = $region70
      $region69: #{first_block_forward.3} parent=5 // pred_region
        %s326 = ssub.s32 %s10, 1
        %s327 = sand.u32 %s23, 1
        %s328 = sand.u32 %s23, 1
        %s329 = smul.addr %s328, 256
        %s330 = scalar_lea.vmem [#allocation2], %s329
        // Predicated region
        $region71: #{first_block_forward.3} parent=69 // pred_check
          %p331 = pneg %p36
        $region72: #{first_block_forward.3} parent=69 // pred_check_branch
          %333 = sbr.rel (%p331) target = $region74
        $region73: #{first_block_forward.3} parent=69 // pred_region
          _
        $region74: #{first_block_forward.3} parent=69 // pred_fallthru
          _
        %s334 = sand.u32 %s23, 1
        %s335 = sand.u32 %s23, 1
        %s336 = smul.addr %s335, 256
        %s337 = scalar_lea.vmem [#allocation2], %s336
        %p338 = pneg %p36
        %p339 = pneg %p33
        %p340 = pneg %p57
        %p341 = pneg %p54
        %p342 = pneg %p78
        %p343 = pneg %p75
        %p344 = pneg %p99
        %p345 = pneg %p96
        %p346 = pneg %p125
        %p347 = pneg %p122
        %s348 = smul.u32 16, %s15
        %p349 = scmp.lt.s32.totalorder %s348, 31
        %s350 = scalar_select %p349, %s348, 31
        %s351 = smul.addr %s350, 8
        %s352 = scalar_lea.vmem %s4, %s351
        %s353 = smul.u32 16, %s15
        %s354 = smul.u32 16, %s15
        %p355 = scmp.lt.s32.totalorder %s354, 31
        %s356 = scalar_select %p355, %s354, 31
        %s357 = smul.addr %s356, 8
        %s358 = scalar_lea.vmem %s4, %s357
        %s359 = smul.u32 16, %s15
        %v361 = vld [vmem:[%s330] sm:$0xff]
        %v362 = vld [vmem:[%s330 + $0x8] sm:$0xff]
        %v363 = vld [vmem:[%s330 + $0x10] sm:$0xff]
        %v364 = vld [vmem:[%s330 + $0x18] sm:$0xff]
        %v365 = vld [vmem:[%s330 + $0x20] sm:$0xff]
        %v366 = vld [vmem:[%s330 + $0x28] sm:$0xff]
        %v367 = vld [vmem:[%s330 + $0x30] sm:$0xff]
        %v368 = vld [vmem:[%s330 + $0x38] sm:$0xff]
        %v369 = vld [vmem:[%s330 + $0x40] sm:$0xff]
        %v370 = vld [vmem:[%s330 + $0x48] sm:$0xff]
        %v371 = vld [vmem:[%s330 + $0x50] sm:$0xff]
        %v372 = vld [vmem:[%s330 + $0x58] sm:$0xff]
        %v373 = vld [vmem:[%s330 + $0x60] sm:$0xff]
        %v374 = vld [vmem:[%s330 + $0x68] sm:$0xff]
        %v375 = vld [vmem:[%s330 + $0x70] sm:$0xff]
        %v376 = vld [vmem:[%s330 + $0x78] sm:$0xff]
        %v377 = vpack.c.bf16 %v362, %v361
        %v378 = vpack.c.bf16 %v364, %v363
        %v379 = vpack.c.bf16 %v366, %v365
        %v380 = vpack.c.bf16 %v368, %v367
        %v381 = vpack.c.bf16 %v370, %v369
        %v382 = vpack.c.bf16 %v372, %v371
        %v383 = vpack.c.bf16 %v374, %v373
        %v384 = vpack.c.bf16 %v376, %v375
        %v385 = vld [vmem:[%s1] sm:$0xf]
        %v386 = vld [vmem:[%s1 + $0x4] sm:$0xf]
        %v387 = vld [vmem:[%s1 + $0x8] sm:$0xf]
        %v388 = vld [vmem:[%s1 + $0xc] sm:$0xf]
        %s389 = scalar_lea.vmem %s330, 128 [#allocation2]
        %v390 = vld [vmem:[%s389] sm:$0xff]
        %v391 = vld [vmem:[%s389 + $0x8] sm:$0xff]
        %v392 = vld [vmem:[%s389 + $0x10] sm:$0xff]
        %v393 = vld [vmem:[%s389 + $0x18] sm:$0xff]
        %v394 = vld [vmem:[%s389 + $0x20] sm:$0xff]
        %v395 = vld [vmem:[%s389 + $0x28] sm:$0xff]
        %v396 = vld [vmem:[%s389 + $0x30] sm:$0xff]
        %v397 = vld [vmem:[%s389 + $0x38] sm:$0xff]
        %v398 = vld [vmem:[%s389 + $0x40] sm:$0xff]
        %v399 = vld [vmem:[%s389 + $0x48] sm:$0xff]
        %v400 = vld [vmem:[%s389 + $0x50] sm:$0xff]
        %v401 = vld [vmem:[%s389 + $0x58] sm:$0xff]
        %v402 = vld [vmem:[%s389 + $0x60] sm:$0xff]
        %v403 = vld [vmem:[%s389 + $0x68] sm:$0xff]
        %v404 = vld [vmem:[%s389 + $0x70] sm:$0xff]
        %v405 = vld [vmem:[%s389 + $0x78] sm:$0xff]
        %v406 = vpack.c.bf16 %v391, %v390
        %v407 = vpack.c.bf16 %v393, %v392
        %v408 = vpack.c.bf16 %v395, %v394
        %v409 = vpack.c.bf16 %v397, %v396
        %v410 = vpack.c.bf16 %v399, %v398
        %v411 = vpack.c.bf16 %v401, %v400
        %v412 = vpack.c.bf16 %v403, %v402
        %v413 = vpack.c.bf16 %v405, %v404
        %s414 = scalar_lea.vmem %s1, 16
        %v415 = vld [vmem:[%s414] sm:$0xf]
        %v416 = vld [vmem:[%s414 + $0x4] sm:$0xf]
        %v417 = vld [vmem:[%s414 + $0x8] sm:$0xf]
        %v418 = vld [vmem:[%s414 + $0xc] sm:$0xf]
        %v423 = vunpack.c.l.b16 %v415
        %v424 = vunpack.c.l.b16 %v416
        %v425 = vunpack.c.l.b16 %v417
        %v426 = vunpack.c.l.b16 %v418
        %v427 = vpack.c.b16 %v424, %v423
        %v428 = vpack.c.b16 %v426, %v425
        %vm431 = vcmask 261120
        %v433 = vsel %vm431, %v406, 0
        %v436 = vsel %vm431, %v407, 0
        %v439 = vsel %vm431, %v408, 0
        %v442 = vsel %vm431, %v409, 0
        %v445 = vsel %vm431, %v410, 0
        %v448 = vsel %vm431, %v411, 0
        %v451 = vsel %vm431, %v412, 0
        %v454 = vsel %vm431, %v413, 0
        %456 = vmatprep.subr.bf16.mxu0 0
        %457 = vmatpush1.bf16.msra.mxu0 0
        %458 = vmatprep.subr.bf16.mxu0 0
        %459 = vmatpush1.bf16.msra.mxu0 0
        %460 = vmatprep.subr.bf16.mxu0 0
        %461 = vmatpush1.bf16.msra.mxu0 0
        %462 = vmatprep.subr.bf16.mxu0 0
        %463 = vmatpush1.bf16.msra.mxu0 0
        %464 = vmatprep.subr.bf16.mxu0 0
        %465 = vmatpush1.bf16.msra.mxu0 0
        %466 = vmatprep.subr.bf16.mxu0 0
        %467 = vmatpush1.bf16.msra.mxu0 0
        %468 = vmatprep.subr.bf16.mxu0 0
        %469 = vmatpush1.bf16.msra.mxu0 %v428
        %470 = vmatprep.subr.bf16.mxu0 0
        %471 = vmatpush1.bf16.msra.mxu0 %v427
        %472 = vmatprep.subr.bf16.mxu0 0
        %473 = vmatpush2.bf16.msra.mxu0 0
        %474 = vmatprep.subr.bf16.mxu0 0
        %475 = vmatpush2.bf16.msra.mxu0 0
        %476 = vmatprep.subr.bf16.mxu0 0
        %477 = vmatpush2.bf16.msra.mxu0 0
        %478 = vmatprep.subr.bf16.mxu0 0
        %479 = vmatpush2.bf16.msra.mxu0 0
        %480 = vmatprep.subr.bf16.mxu0 0
        %481 = vmatpush2.bf16.msra.mxu0 0
        %482 = vmatprep.subr.bf16.mxu0 0
        %483 = vmatpush2.bf16.msra.mxu0 0
        %484 = vmatprep.subr.bf16.mxu0 0
        %485 = vmatpush2.bf16.msra.mxu0 0
        %486 = vmatprep.subr.bf16.mxu0 0
        %487 = vmatpush2.bf16.msra.mxu0 0
        %488 = vmatprep.mubr.bf16.mxu0 0
        %489 = vmatmul.mubr.bf16.gmra.mxu0 %v433
        %v490 = vpop.f32.mrf.mxu0
        %v491 = vadd.f32 0.0, %v490
        %v492 = vpop.f32.mrf.mxu0
        %v493 = vpop.f32.mrf.mxu0
        %v494 = vadd.f32 0.0, %v493
        %v495 = vpop.f32.mrf.mxu0
        %496 = vmatprep.mubr.bf16.mxu0 0
        %497 = vmatmul.mubr.bf16.gmra.mxu0 %v436
        %v498 = vpop.f32.mrf.mxu0
        %v499 = vadd.f32 0.0, %v498
        %v500 = vpop.f32.mrf.mxu0
        %v501 = vpop.f32.mrf.mxu0
        %v502 = vadd.f32 0.0, %v501
        %v503 = vpop.f32.mrf.mxu0
        %504 = vmatprep.mubr.bf16.mxu0 0
        %505 = vmatmul.mubr.bf16.gmra.mxu0 %v439
        %v506 = vpop.f32.mrf.mxu0
        %v507 = vadd.f32 0.0, %v506
        %v508 = vpop.f32.mrf.mxu0
        %v509 = vpop.f32.mrf.mxu0
        %v510 = vadd.f32 0.0, %v509
        %v511 = vpop.f32.mrf.mxu0
        %512 = vmatprep.mubr.bf16.mxu0 0
        %513 = vmatmul.mubr.bf16.gmra.mxu0 %v442
        %v514 = vpop.f32.mrf.mxu0
        %v515 = vadd.f32 0.0, %v514
        %v516 = vpop.f32.mrf.mxu0
        %v517 = vpop.f32.mrf.mxu0
        %v518 = vadd.f32 0.0, %v517
        %v519 = vpop.f32.mrf.mxu0
        %520 = vmatprep.mubr.bf16.mxu0 0
        %521 = vmatmul.mubr.bf16.gmra.mxu0 %v445
        %v522 = vpop.f32.mrf.mxu0
        %v523 = vadd.f32 0.0, %v522
        %v524 = vpop.f32.mrf.mxu0
        %v525 = vpop.f32.mrf.mxu0
        %v526 = vadd.f32 0.0, %v525
        %v527 = vpop.f32.mrf.mxu0
        %528 = vmatprep.mubr.bf16.mxu0 0
        %529 = vmatmul.mubr.bf16.gmra.mxu0 %v448
        %v530 = vpop.f32.mrf.mxu0
        %v531 = vadd.f32 0.0, %v530
        %v532 = vpop.f32.mrf.mxu0
        %v533 = vpop.f32.mrf.mxu0
        %v534 = vadd.f32 0.0, %v533
        %v535 = vpop.f32.mrf.mxu0
        %536 = vmatprep.mubr.bf16.mxu0 0
        %537 = vmatmul.mubr.bf16.gmra.mxu0 %v451
        %v538 = vpop.f32.mrf.mxu0
        %v539 = vadd.f32 0.0, %v538
        %v540 = vpop.f32.mrf.mxu0
        %v541 = vpop.f32.mrf.mxu0
        %v542 = vadd.f32 0.0, %v541
        %v543 = vpop.f32.mrf.mxu0
        %544 = vmatprep.mubr.bf16.mxu0 0
        %545 = vmatmul.mubr.bf16.gmra.mxu0 %v454
        %v546 = vpop.f32.mrf.mxu0
        %v547 = vadd.f32 0.0, %v546
        %v548 = vpop.f32.mrf.mxu0
        %v549 = vpop.f32.mrf.mxu0
        %v550 = vadd.f32 0.0, %v549
        %v551 = vpop.f32.mrf.mxu0
        %552 = vdwg.mxu0
        %v557 = vunpack.c.l.b16 %v385
        %v558 = vunpack.c.l.b16 %v386
        %v559 = vunpack.c.l.b16 %v387
        %v560 = vunpack.c.l.b16 %v388
        %v561 = vpack.c.b16 %v558, %v557
        %v562 = vpack.c.b16 %v560, %v559
        %v566 = vsel %vm431, %v377, 0
        %v569 = vsel %vm431, %v378, 0
        %v572 = vsel %vm431, %v379, 0
        %v575 = vsel %vm431, %v380, 0
        %v578 = vsel %vm431, %v381, 0
        %v581 = vsel %vm431, %v382, 0
        %v584 = vsel %vm431, %v383, 0
        %v587 = vsel %vm431, %v384, 0
        %589 = vmatprep.subr.bf16.mxu0 0
        %590 = vmatpush1.bf16.msra.mxu0 0
        %591 = vmatprep.subr.bf16.mxu0 0
        %592 = vmatpush1.bf16.msra.mxu0 0
        %593 = vmatprep.subr.bf16.mxu0 0
        %594 = vmatpush1.bf16.msra.mxu0 0
        %595 = vmatprep.subr.bf16.mxu0 0
        %596 = vmatpush1.bf16.msra.mxu0 0
        %597 = vmatprep.subr.bf16.mxu0 0
        %598 = vmatpush1.bf16.msra.mxu0 0
        %599 = vmatprep.subr.bf16.mxu0 0
        %600 = vmatpush1.bf16.msra.mxu0 0
        %601 = vmatprep.subr.bf16.mxu0 0
        %602 = vmatpush1.bf16.msra.mxu0 %v562
        %603 = vmatprep.subr.bf16.mxu0 0
        %604 = vmatpush1.bf16.msra.mxu0 %v561
        %605 = vmatprep.subr.bf16.mxu0 0
        %606 = vmatpush2.bf16.msra.mxu0 0
        %607 = vmatprep.subr.bf16.mxu0 0
        %608 = vmatpush2.bf16.msra.mxu0 0
        %609 = vmatprep.subr.bf16.mxu0 0
        %610 = vmatpush2.bf16.msra.mxu0 0
        %611 = vmatprep.subr.bf16.mxu0 0
        %612 = vmatpush2.bf16.msra.mxu0 0
        %613 = vmatprep.subr.bf16.mxu0 0
        %614 = vmatpush2.bf16.msra.mxu0 0
        %615 = vmatprep.subr.bf16.mxu0 0
        %616 = vmatpush2.bf16.msra.mxu0 0
        %617 = vmatprep.subr.bf16.mxu0 0
        %618 = vmatpush2.bf16.msra.mxu0 0
        %619 = vmatprep.subr.bf16.mxu0 0
        %620 = vmatpush2.bf16.msra.mxu0 0
        %621 = vmatprep.mubr.bf16.mxu0 0
        %622 = vmatmul.mubr.bf16.gmra.mxu0 %v566
        %v623 = vpop.f32.mrf.mxu0
        %v624 = vadd.f32 %v491, %v623
        %v625 = vpop.f32.mrf.mxu0
        %v626 = vpop.f32.mrf.mxu0
        %v627 = vadd.f32 %v494, %v626
        %v628 = vpop.f32.mrf.mxu0
        %629 = vmatprep.mubr.bf16.mxu0 0
        %630 = vmatmul.mubr.bf16.gmra.mxu0 %v569
        %v631 = vpop.f32.mrf.mxu0
        %v632 = vadd.f32 %v499, %v631
        %v633 = vpop.f32.mrf.mxu0
        %v634 = vpop.f32.mrf.mxu0
        %v635 = vadd.f32 %v502, %v634
        %v636 = vpop.f32.mrf.mxu0
        %637 = vmatprep.mubr.bf16.mxu0 0
        %638 = vmatmul.mubr.bf16.gmra.mxu0 %v572
        %v639 = vpop.f32.mrf.mxu0
        %v640 = vadd.f32 %v507, %v639
        %v641 = vpop.f32.mrf.mxu0
        %v642 = vpop.f32.mrf.mxu0
        %v643 = vadd.f32 %v510, %v642
        %v644 = vpop.f32.mrf.mxu0
        %645 = vmatprep.mubr.bf16.mxu0 0
        %646 = vmatmul.mubr.bf16.gmra.mxu0 %v575
        %v647 = vpop.f32.mrf.mxu0
        %v648 = vadd.f32 %v515, %v647
        %v649 = vpop.f32.mrf.mxu0
        %v650 = vpop.f32.mrf.mxu0
        %v651 = vadd.f32 %v518, %v650
        %v652 = vpop.f32.mrf.mxu0
        %653 = vmatprep.mubr.bf16.mxu0 0
        %654 = vmatmul.mubr.bf16.gmra.mxu0 %v578
        %v655 = vpop.f32.mrf.mxu0
        %v656 = vadd.f32 %v523, %v655
        %v657 = vpop.f32.mrf.mxu0
        %v658 = vpop.f32.mrf.mxu0
        %v659 = vadd.f32 %v526, %v658
        %v660 = vpop.f32.mrf.mxu0
        %661 = vmatprep.mubr.bf16.mxu0 0
        %662 = vmatmul.mubr.bf16.gmra.mxu0 %v581
        %v663 = vpop.f32.mrf.mxu0
        %v664 = vadd.f32 %v531, %v663
        %v665 = vpop.f32.mrf.mxu0
        %v666 = vpop.f32.mrf.mxu0
        %v667 = vadd.f32 %v534, %v666
        %v668 = vpop.f32.mrf.mxu0
        %669 = vmatprep.mubr.bf16.mxu0 0
        %670 = vmatmul.mubr.bf16.gmra.mxu0 %v584
        %v671 = vpop.f32.mrf.mxu0
        %v672 = vadd.f32 %v539, %v671
        %v673 = vpop.f32.mrf.mxu0
        %v674 = vpop.f32.mrf.mxu0
        %v675 = vadd.f32 %v542, %v674
        %v676 = vpop.f32.mrf.mxu0
        %677 = vmatprep.mubr.bf16.mxu0 0
        %678 = vmatmul.mubr.bf16.gmra.mxu0 %v587
        %v679 = vpop.f32.mrf.mxu0
        %v680 = vadd.f32 %v547, %v679
        %v681 = vpop.f32.mrf.mxu0
        %v682 = vpop.f32.mrf.mxu0
        %v683 = vadd.f32 %v550, %v682
        %v684 = vpop.f32.mrf.mxu0
        %685 = vdwg.mxu0
        %v686 = vld [vmem:[%s2] sm:$0x1]
        %v688 = vlaneseq
        %v689 = vshrl.u32 %v688, 7
        %v690 = vsub.s32 0, %v689
        %v691 = vrot.slane %v686, %v690
        %v693 = vmul.f32 %v624, %v691
        %v694 = vmul.f32 %v627, %v691
        %v695 = vmul.f32 %v632, %v691
        %v696 = vmul.f32 %v635, %v691
        %v697 = vmul.f32 %v640, %v691
        %v698 = vmul.f32 %v643, %v691
        %v699 = vmul.f32 %v648, %v691
        %v700 = vmul.f32 %v651, %v691
        %v701 = vmul.f32 %v656, %v691
        %v702 = vmul.f32 %v659, %v691
        %v703 = vmul.f32 %v664, %v691
        %v704 = vmul.f32 %v667, %v691
        %v705 = vmul.f32 %v672, %v691
        %v706 = vmul.f32 %v675, %v691
        %v707 = vmul.f32 %v680, %v691
        %v708 = vmul.f32 %v683, %v691
        %v709 = vld [vmem:[%s3] sm:$0x1]
        %v711 = vlaneseq
        %v712 = vshrl.u32 %v711, 7
        %v713 = vsub.s32 0, %v712
        %v714 = vrot.slane %v709, %v713
        %v716 = vadd.f32 %v693, %v714
        %v717 = vadd.f32 %v694, %v714
        %v718 = vadd.f32 %v695, %v714
        %v719 = vadd.f32 %v696, %v714
        %v720 = vadd.f32 %v697, %v714
        %v721 = vadd.f32 %v698, %v714
        %v722 = vadd.f32 %v699, %v714
        %v723 = vadd.f32 %v700, %v714
        %v724 = vadd.f32 %v701, %v714
        %v725 = vadd.f32 %v702, %v714
        %v726 = vadd.f32 %v703, %v714
        %v727 = vadd.f32 %v704, %v714
        %v728 = vadd.f32 %v705, %v714
        %v729 = vadd.f32 %v706, %v714
        %v730 = vadd.f32 %v707, %v714
        %v731 = vadd.f32 %v708, %v714
        %v732 = vmax.f32 %v716, 0.0
        %v733 = vmax.f32 %v717, 0.0
        %v734 = vmax.f32 %v718, 0.0
        %v735 = vmax.f32 %v719, 0.0
        %v736 = vmax.f32 %v720, 0.0
        %v737 = vmax.f32 %v721, 0.0
        %v738 = vmax.f32 %v722, 0.0
        %v739 = vmax.f32 %v723, 0.0
        %v740 = vmax.f32 %v724, 0.0
        %v741 = vmax.f32 %v725, 0.0
        %v742 = vmax.f32 %v726, 0.0
        %v743 = vmax.f32 %v727, 0.0
        %v744 = vmax.f32 %v728, 0.0
        %v745 = vmax.f32 %v729, 0.0
        %v746 = vmax.f32 %v730, 0.0
        %v747 = vmax.f32 %v731, 0.0
        %748 = vst.msk [vmem:[%s358] sm:$0xff] %vm431, %v732
        %749 = vst.msk [vmem:[%s358 + $0x8] sm:$0xff] %vm431, %v733
        %750 = vst.msk [vmem:[%s358 + $0x10] sm:$0xff] %vm431, %v734
        %751 = vst.msk [vmem:[%s358 + $0x18] sm:$0xff] %vm431, %v735
        %752 = vst.msk [vmem:[%s358 + $0x20] sm:$0xff] %vm431, %v736
        %753 = vst.msk [vmem:[%s358 + $0x28] sm:$0xff] %vm431, %v737
        %754 = vst.msk [vmem:[%s358 + $0x30] sm:$0xff] %vm431, %v738
        %755 = vst.msk [vmem:[%s358 + $0x38] sm:$0xff] %vm431, %v739
        %756 = vst.msk [vmem:[%s358 + $0x40] sm:$0xff] %vm431, %v740
        %757 = vst.msk [vmem:[%s358 + $0x48] sm:$0xff] %vm431, %v741
        %758 = vst.msk [vmem:[%s358 + $0x50] sm:$0xff] %vm431, %v742
        %759 = vst.msk [vmem:[%s358 + $0x58] sm:$0xff] %vm431, %v743
        %760 = vst.msk [vmem:[%s358 + $0x60] sm:$0xff] %vm431, %v744
        %761 = vst.msk [vmem:[%s358 + $0x68] sm:$0xff] %vm431, %v745
        %762 = vst.msk [vmem:[%s358 + $0x70] sm:$0xff] %vm431, %v746
        %763 = vst.msk [vmem:[%s358 + $0x78] sm:$0xff] %vm431, %v747
        %s764 = smul.u32 16, %s15
        %p765 = scmp.lt.s32.totalorder %s764, 31
        %s766 = scalar_select %p765, %s764, 31
        %s767 = smul.addr %s766, 8
        %s768 = scalar_lea.vmem %s4, %s767
        // Predicated region
        $region75: #{first_block_forward.3} parent=69 // pred_check
          %p769 = pneg %p122
        $region76: #{first_block_forward.3} parent=69 // pred_check_branch
          %771 = sbr.rel (%p769) target = $region78
        $region77: #{first_block_forward.3} parent=69 // pred_region
          %s772 = smul.u32 16, %s15
        $region78: #{first_block_forward.3} parent=69 // pred_fallthru
          _
      $region70: #{first_block_forward.3} parent=5 // pred_fallthru
        _
      %p773 = scmp.le.s32.totalorder 2, %s10
      // Predicated region
      $region79: #{first_block_forward.3} parent=5 // pred_check
        %p774 = pneg %p773
      $region80: #{first_block_forward.3} parent=5 // pred_check_branch
        %776 = sbr.rel (%p774) target = $region82
      $region81: #{first_block_forward.3} parent=5 // pred_region
        %s777 = ssub.s32 %s10, 2
        // Predicated region
        $region83: #{first_block_forward.3} parent=81 // pred_check
          %p778 = pneg %p128
        $region84: #{first_block_forward.3} parent=81 // pred_check_branch
          %780 = sbr.rel (%p778) target = $region86
        $region85: #{first_block_forward.3} parent=81 // pred_region
          %s781 = smul.u32 16, %s16
          %p782 = scmp.lt.s32.totalorder %s781, 31
          %s783 = scalar_select %p782, %s781, 31
          %s784 = smul.addr %s783, 8
          %s785 = scalar_lea.vmem %s4, %s784
        $region86: #{first_block_forward.3} parent=81 // pred_fallthru
          _
      $region82: #{first_block_forward.3} parent=5 // pred_fallthru
        _
    $region6: #{first_block_forward.3} parent=1 // loop_footer
      %s14 = sadd.s32 1, %s10
    $region7: #{first_block_forward.3} parent=1 // loop_footer_branch
      %9 = sbr.rel target = $region3
    $region8: #{first_block_forward.3} parent=1 // loop_exit
      _

</llo_original>
